<compile_context>
chip_gen: v7x
topology: tpu7x:2x2x1
jax: 0.10.0
libtpu: 0.0.40
codegen_flags: <defaults>
</compile_context>

<pallas_src>
import functools

import jax
import jax.numpy as jnp
from jax import lax
from jax.experimental import pallas as pl
from jax.experimental.pallas import tpu as pltpu


def _round_up(x, m):
    return ((x + m - 1) // m) * m


# --------------------------------------------------------------------------------------
# Kernel
# --------------------------------------------------------------------------------------
def cheb_conv_kernel(x_ref, w_ref, theta_ref, o_ref, *, K, fuse_kdim, mm_dtype):
    # x_ref:     (B, V, F_in)           batch block
    # w_ref:     (B, V, V)              batch block of adjacencies (f32 or bf16)
    # theta_ref: (K*F_in, F_out_p)      if fuse_kdim else (K, F_in, F_out_p), resident
    # o_ref:     (B, V, F_out_p)
    B, V, F_in = x_ref.shape
    F_out = o_ref.shape[2]

    x = x_ref[...].astype(jnp.float32)          # (B, V, F_in)
    Wf = w_ref[...].astype(jnp.float32)         # (B, V, V)  upcast if streamed as bf16

    def for_mxu(a):                             # cast MXU operands only (opt-in bf16)
        return a if mm_dtype is None else a.astype(mm_dtype)

    # Fused scaled Laplacian: L_t = D - W - I with D = diag(column sums of W).
    row = lax.broadcasted_iota(jnp.int32, (V, V), 0)
    col = lax.broadcasted_iota(jnp.int32, (V, V), 1)
    diag = row == col                                            # (V, V)
    d = jnp.sum(Wf, axis=1)                                      # (B, V) column sums
    L_t = jnp.where(diag[None], d[:, None, :] - 1.0, 0.0) - Wf   # (B, V, V)

    x_mm = for_mxu(x)

    if fuse_kdim:
        z_parts = [x]                            # Z_0 = x (T_0 = I, never materialized)
        acc = None
    else:
        # Streaming accumulate: acc += Z_k @ theta_k  (no narrow-lane concat).
        acc = jnp.dot(for_mxu(x.reshape(B * V, F_in)), for_mxu(theta_ref[0]),
                      preferred_element_type=jnp.float32)        # (B*V, F_out_p)

    if K >= 2:
        L2 = L_t + L_t                           # hoisted: 2*L_t computed ONCE, not per k
        t_prev2 = diag.astype(jnp.float32)       # T_0 = I (broadcasts over the batch)
        t_prev = L_t                             # T_1
        for k in range(1, K):
            if k >= 2:
                t_new = L2 * t_prev - t_prev2    # elementwise, exactly like the torch code
                t_prev2, t_prev = t_prev, t_new
            z_k = jnp.einsum("bij,bjf->bif", for_mxu(t_prev), x_mm,
                             preferred_element_type=jnp.float32)     # (B, V, F_in)
            if fuse_kdim:
                z_parts.append(z_k)
            else:
                acc = acc + jnp.dot(for_mxu(z_k.reshape(B * V, F_in)),
                                    for_mxu(theta_ref[k]),
                                    preferred_element_type=jnp.float32)

    if fuse_kdim:
        # Tile-aligned (F_in % 128 == 0): fuse the K theta matmuls into one deep matmul.
        z = z_parts[0] if K == 1 else jnp.concatenate(z_parts, axis=-1)  # (B, V, K*F_in)
        acc = jnp.dot(for_mxu(z.reshape(B * V, K * F_in)), for_mxu(theta_ref[...]),
                      preferred_element_type=jnp.float32)

    o_ref[...] = jnp.maximum(acc, 0.0).reshape(B, V, F_out)


# --------------------------------------------------------------------------------------
# Sizing helpers (generation-aware)
# --------------------------------------------------------------------------------------
def _vmem_capacity_bytes():
    try:
        return int(pltpu.get_tpu_info().vmem_capacity_bytes)
    except Exception:
        pass
    try:
        kind = jax.devices()[0].device_kind.lower()
        if "v5 lite" in kind or "v5e" in kind or "v6" in kind:
            return 128 * 1024 * 1024
    except Exception:
        pass
    return 64 * 1024 * 1024            # conservative (v7x-sized physical VMEM)


def _vmem_budgets():
    cap = _vmem_capacity_bytes()
    if cap >= 100 * 1024 * 1024:       # v5e / v6e: 128 MiB physical VMEM
        return 40 * 1024 * 1024, 96 * 1024 * 1024
    return 16 * 1024 * 1024, 48 * 1024 * 1024   # v7x: 64 MiB physical VMEM


def _working_set_per_batch_elem(V, F_in, F_out_p, K, w_bytes, fuse_kdim):
    z_live = (K + 1) if fuse_kdim else 2
    return (
        2 * (V * F_in * 4 + V * V * w_bytes + V * F_out_p * 4)   # double-buffered I/O blocks
        + 6 * V * V * 4                                          # Wf / L_t / L2 / T_{k-2,k-1,k}
        + (z_live + 1) * V * F_in * 4                            # x (+ live Z_k / concat slab)
        + 2 * V * F_out_p * 4                                    # accumulator + relu temp
    )


def _choose_block_batch(N, per_elem, theta_resident_bytes, budget_bytes, min_steps=4):
    avail = max(budget_bytes - theta_resident_bytes, per_elem)
    b_budget = max(1, avail // max(per_elem, 1))
    steps_wanted = min(min_steps, N)                 # >= 4 steps when possible (v7x 2 TCs)
    b_cap = max(1, N // steps_wanted)
    b_target = max(1, min(int(b_budget), b_cap, N))
    # Pick a divisor of N so the wrapper never pads/copies W (the dominant HBM tensor).
    return max(d for d in range(1, b_target + 1) if N % d == 0)


# --------------------------------------------------------------------------------------
# Wrapper
# --------------------------------------------------------------------------------------
def cheb_conv(x, W, theta, *, block_batch=None, w_dtype=jnp.float32, mm_dtype=None,
              pad_factor_limit=2, theta_single_buffer=True):
    """x: (N,V,F_in) f32, W: (N,V,V), theta: (K,F_in,F_out) f32 -> relu(sum_k T_k x theta_k)."""
    N, V, F_in = x.shape
    K, F_in_t, F_out = theta.shape
    assert F_in_t == F_in

    # Lane padding of F_out only when cheap: never inflate output blocks / HBM writeback
    # by more than pad_factor_limit (so 8 is NOT padded to 128).
    F_out_128 = _round_up(F_out, 128)
    F_out_p = F_out_128 if F_out_128 <= pad_factor_limit * F_out else F_out

    fuse_kdim = (K > 1) and (F_in % 128 == 0)

    w_bytes = jnp.dtype(w_dtype).itemsize
    budget_bytes, vmem_limit = _vmem_budgets()
    per_elem = _working_set_per_batch_elem(V, F_in, F_out_p, K, w_bytes, fuse_kdim)
    theta_resident = (1 if theta_single_buffer else 2) * K * F_in * F_out_p * 4
    if per_elem + theta_resident > vmem_limit:
        # TODO(synk): add a V-tiled path (second grid axis over T_k row blocks) for very
        # large graphs; for now fail loudly instead of compiling an un-pipelined kernel.
        raise ValueError(
            f"cheb_conv: per-batch-element working set (~{per_elem / 2**20:.1f} MiB) "
            f"exceeds the VMEM limit ({vmem_limit / 2**20:.0f} MiB); V={V} is too large "
            "without V-tiling.")

    if block_batch is not None:
        bb = max(1, min(int(block_batch), N))
        B = max(d for d in range(1, bb + 1) if N % d == 0)   # nearest divisor, no W pad
    else:
        B = _choose_block_batch(N, per_elem, theta_resident, budget_bytes)
    n_steps = N // B

    x_f = x.astype(jnp.float32)
    W_f = W.astype(w_dtype)          # optionally stream the dominant HBM traffic as bf16

    theta_f = theta.astype(jnp.float32)
    if F_out_p != F_out:
        theta_f = jnp.pad(theta_f, ((0, 0), (0, 0), (0, F_out_p - F_out)))
    if fuse_kdim:
        theta_in = theta_f.reshape(K * F_in, F_out_p)        # free reshape (vstack over k)
        theta_block, theta_map = (K * F_in, F_out_p), (lambda n: (0, 0))
    else:
        theta_in = theta_f
        theta_block, theta_map = (K, F_in, F_out_p), (lambda n: (0, 0, 0))

    kernel = functools.partial(cheb_conv_kernel, K=K, fuse_kdim=fuse_kdim,
                               mm_dtype=mm_dtype)

    flops = (2 * N * V * V * F_in * max(K - 1, 0)            # batched T_k @ x
             + 2 * N * V * F_in * F_out_p * K                # theta matmuls
             + 3 * N * V * V * max(K - 2, 0))                # elementwise recurrence
    bytes_accessed = (N * V * V * w_bytes + N * V * F_in * 4
                      + N * V * F_out_p * 4 + K * F_in * F_out_p * 4)
    cost = pl.CostEstimate(flops=int(flops), transcendentals=0,
                           bytes_accessed=int(bytes_accessed))

    def build(theta_spec):
        return pl.pallas_call(
            kernel,
            out_shape=jax.ShapeDtypeStruct((N, V, F_out_p), jnp.float32),
            grid_spec=pltpu.PrefetchScalarGridSpec(
                num_scalar_prefetch=0,
                grid=(n_steps,),
                in_specs=[
                    pl.BlockSpec((B, V, F_in), lambda n: (n, 0, 0)),
                    pl.BlockSpec((B, V, V), lambda n: (n, 0, 0)),
                    theta_spec,                                   # resident across the grid
                ],
                out_specs=pl.BlockSpec((B, V, F_out_p), lambda n: (n, 0, 0)),
            ),
            compiler_params=pltpu.CompilerParams(
                dimension_semantics=("parallel",),                # batch blocks independent
                vmem_limit_bytes=vmem_limit,
            ),
            cost_estimate=cost,
        )

    if theta_single_buffer:
        try:
            # Constant index_map -> theta is never re-fetched; one VMEM buffer suffices.
            out = build(pl.BlockSpec(theta_block, theta_map,
                                     pipeline_mode=pl.Buffered(1)))(x_f, W_f, theta_in)
        except Exception:   # pragma: no cover — fall back if single-buffering is rejected
            out = build(pl.BlockSpec(theta_block, theta_map))(x_f, W_f, theta_in)
    else:
        out = build(pl.BlockSpec(theta_block, theta_map))(x_f, W_f, theta_in)

    if F_out_p != F_out:
        out = out[..., :F_out]
    return out


# --------------------------------------------------------------------------------------
# Pure-JAX reference mirroring the PyTorch forward pass
# --------------------------------------------------------------------------------------
def cheb_conv_ref(x, W, theta):
    N, V, _ = x.shape
    K = theta.shape[0]
    eye = jnp.eye(V, dtype=jnp.float32)
    d = jnp.sum(W, axis=1)                                  # (N, V)
    D = eye[None] * d[:, :, None]                           # diag_embed(d)
    L_t = D - W - eye[None]
    T = [jnp.broadcast_to(eye, (N, V, V)), L_t]
    for i in range(2, K):
        T.append(2.0 * L_t * T[i - 1] - T[i - 2])           # elementwise, like torch code
    out = jnp.zeros((N, V, theta.shape[2]), dtype=jnp.float32)
    for k in range(K):
        rhs = jnp.einsum("nij,njf->nif", T[k], x)
        out = out + jnp.einsum("nif,fo->nio", rhs, theta[k])
    return jnp.maximum(out, 0.0)


if __name__ == "__main__":
    key = jax.random.PRNGKey(0)

    # x: (N, V, F_in), W: (N, V, V), Theta: (K, F_in, F_out)
    N, V, F_in, F_out, K = 2, 16, 8, 8, 3
    kx, kw, kt = jax.random.split(key, 3)
    x = jax.random.normal(kx, (N, V, F_in), dtype=jnp.float32)
    W = jax.random.uniform(kw, (N, V, V), dtype=jnp.float32)
    theta = jax.random.uniform(kt, (K, F_in, F_out), dtype=jnp.float32)

    out = jax.block_until_ready(cheb_conv(x, W, theta))
    ref = cheb_conv_ref(x, W, theta)
    assert out.shape == (N, V, F_out)
    assert jnp.allclose(out, ref, rtol=1e-5, atol=1e-5), "f32 path mismatch vs reference"

    # bf16-streamed adjacency (halves the dominant HBM traffic); the reference uses the
    # same bf16-rounded W (kernel upcasts and accumulates in f32).
    out_bf16 = jax.block_until_ready(cheb_conv(x, W, theta, w_dtype=jnp.bfloat16))
    W_q = W.astype(jnp.bfloat16).astype(jnp.float32)
    ref_bf16 = cheb_conv_ref(x, W_q, theta)
    assert jnp.allclose(out_bf16, ref_bf16, rtol=1e-4, atol=1e-4), "bf16-W path mismatch"

    # Opt-in bf16 MXU-operand path (recurrence / accumulation stay f32): loose check.
    out_mm = jax.block_until_ready(cheb_conv(x, W, theta, mm_dtype=jnp.bfloat16))
    rel_err = jnp.max(jnp.abs(out_mm - ref)) / (jnp.max(jnp.abs(ref)) + 1e-6)
    assert float(rel_err) < 5e-2, "bf16-MXU path mismatch"

    # Odd batch: divisor-based blocking (no W padding) and a longer recurrence.
    N2, V2, F_in2, F_out2, K2 = 5, 16, 8, 8, 4
    kx2, kw2, kt2 = jax.random.split(jax.random.PRNGKey(1), 3)
    x2 = jax.random.normal(kx2, (N2, V2, F_in2), dtype=jnp.float32)
    W2 = jax.random.uniform(kw2, (N2, V2, V2), dtype=jnp.float32)
    theta2 = jax.random.uniform(kt2, (K2, F_in2, F_out2), dtype=jnp.float32)
    out2 = jax.block_until_ready(cheb_conv(x2, W2, theta2))
    ref2 = cheb_conv_ref(x2, W2, theta2)
    assert out2.shape == (N2, V2, F_out2)
    assert jnp.allclose(out2, ref2, rtol=1e-5, atol=1e-5), "odd-batch path mismatch"

    # Fused K-dim slab path (F_in % 128 == 0) with an already lane-dense F_out.
    N3, V3, F_in3, F_out3, K3 = 4, 8, 128, 128, 3
    kx3, kw3, kt3 = jax.random.split(jax.random.PRNGKey(2), 3)
    x3 = jax.random.normal(kx3, (N3, V3, F_in3), dtype=jnp.float32)
    W3 = jax.random.uniform(kw3, (N3, V3, V3), dtype=jnp.float32)
    theta3 = jax.random.uniform(kt3, (K3, F_in3, F_out3), dtype=jnp.float32) * 0.1
    out3 = jax.block_until_ready(cheb_conv(x3, W3, theta3))
    ref3 = cheb_conv_ref(x3, W3, theta3)
    assert jnp.allclose(out3, ref3, rtol=1e-3, atol=1e-3), "fused-K path mismatch"

    print("KERNEL_OK")
</pallas_src>

<mosaic_0001>
module attributes {stable_mosaic.version = 11 : i64} {
  func.func @cheb_conv_kernel(%arg0: i32, %arg1: memref<1x16x8xf32, #tpu.memory_space<vmem>>, %arg2: memref<1x16x16xf32, #tpu.memory_space<vmem>>, %arg3: memref<3x8x8xf32, #tpu.memory_space<vmem>>, %arg4: memref<1x16x8xf32, #tpu.memory_space<vmem>>) attributes {dimension_semantics = [#tpu.dimension_semantics<parallel>], iteration_bounds = array<i64: 2>, scalar_prefetch = 0 : i64, scratch_operands = 0 : i64, tpu.core_type = #tpu.core_type<tc>, window_params = [{transform_indices = @transform_0, window_bounds = array<i64: 1, 16, 8>}, {transform_indices = @transform_1, window_bounds = array<i64: 1, 16, 16>}, {pipeline_mode = #tpu.pipeline_mode<synchronous>, transform_indices = @transform_2, window_bounds = array<i64: 3, 8, 8>}, {transform_indices = @transform_3, window_bounds = array<i64: 1, 16, 8>}]} {
    %c0 = arith.constant 0 : index
    %c0_0 = arith.constant 0 : index
    %c0_1 = arith.constant 0 : index
    %0 = vector.load %arg1[%c0, %c0_0, %c0_1] : memref<1x16x8xf32, #tpu.memory_space<vmem>>, vector<1x16x8xf32>
    %c0_2 = arith.constant 0 : index
    %c0_3 = arith.constant 0 : index
    %c0_4 = arith.constant 0 : index
    %1 = vector.load %arg2[%c0_2, %c0_3, %c0_4] : memref<1x16x16xf32, #tpu.memory_space<vmem>>, vector<1x16x16xf32>
    %2 = tpu.iota {dimensions = array<i32: 0>} : vector<16x16xi32>
    %3 = tpu.iota {dimensions = array<i32: 1>} : vector<16x16xi32>
    %4 = arith.cmpi eq, %2, %3 : vector<16x16xi32>
    %cst = arith.constant dense<0.000000e+00> : vector<1x16xf32>
    %5 = vector.multi_reduction <add>, %1, %cst [1] : vector<1x16x16xf32> to vector<1x16xf32>
    %6 = vector.shape_cast %4 : vector<16x16xi1> to vector<1x16x16xi1>
    %7 = vector.shape_cast %5 : vector<1x16xf32> to vector<1x1x16xf32>
    %cst_5 = arith.constant 1.000000e+00 : f32
    %8 = vector.broadcast %cst_5 : f32 to vector<1x1x16xf32>
    %9 = arith.subf %7, %8 : vector<1x1x16xf32>
    %cst_6 = arith.constant 0.000000e+00 : f32
    %10 = vector.shape_cast %9 : vector<1x1x16xf32> to vector<1x1x16xf32>
    %11 = vector.broadcast %10 : vector<1x1x16xf32> to vector<1x16x16xf32>
    %12 = vector.broadcast %cst_6 : f32 to vector<1x16x16xf32>
    %13 = arith.select %6, %11, %12 : vector<1x16x16xi1>, vector<1x16x16xf32>
    %14 = arith.subf %13, %1 : vector<1x16x16xf32>
    %15 = vector.shape_cast %0 : vector<1x16x8xf32> to vector<16x8xf32>
    %c0_7 = arith.constant 0 : index
    %c0_8 = arith.constant 0 : index
    %c0_9 = arith.constant 0 : index
    %16 = vector.load %arg3[%c0_7, %c0_8, %c0_9] : memref<3x8x8xf32, #tpu.memory_space<vmem>>, vector<1x8x8xf32>
    %17 = vector.shape_cast %16 : vector<1x8x8xf32> to vector<8x8xf32>
    %cst_10 = arith.constant dense<0.000000e+00> : vector<16x8xf32>
    %18 = tpu.matmul %15, %17, %cst_10 {dimension_numbers = #tpu.dot_dimension_numbers<[1], [0], [0], [1], [0, 0, 1, 1], [], []>} : vector<16x8xf32>, vector<8x8xf32>, vector<16x8xf32> -> vector<16x8xf32>
    %19 = arith.addf %14, %14 : vector<1x16x16xf32>
    %20 = arith.extui %4 : vector<16x16xi1> to vector<16x16xi32>
    %21 = arith.sitofp %20 : vector<16x16xi32> to vector<16x16xf32>
    "tpu.trace_start"() <{level = 10 : i32, message = "bij,bjf->bif"}> : () -> ()
    %cst_11 = arith.constant dense<0.000000e+00> : vector<1x16x8xf32>
    %22 = tpu.matmul %14, %0, %cst_11 {dimension_numbers = #tpu.dot_dimension_numbers<[2], [1], [1], [2], [0, 0, 0, 1, 1, 2], [0], [0]>} : vector<1x16x16xf32>, vector<1x16x8xf32>, vector<1x16x8xf32> -> vector<1x16x8xf32>
    "tpu.trace_stop"() : () -> ()
    %23 = vector.shape_cast %22 : vector<1x16x8xf32> to vector<16x8xf32>
    %c1 = arith.constant 1 : index
    %c0_12 = arith.constant 0 : index
    %c0_13 = arith.constant 0 : index
    %24 = vector.load %arg3[%c1, %c0_12, %c0_13] : memref<3x8x8xf32, #tpu.memory_space<vmem>>, vector<1x8x8xf32>
    %25 = vector.shape_cast %24 : vector<1x8x8xf32> to vector<8x8xf32>
    %cst_14 = arith.constant dense<0.000000e+00> : vector<16x8xf32>
    %26 = tpu.matmul %23, %25, %cst_14 {dimension_numbers = #tpu.dot_dimension_numbers<[1], [0], [0], [1], [0, 0, 1, 1], [], []>} : vector<16x8xf32>, vector<8x8xf32>, vector<16x8xf32> -> vector<16x8xf32>
    %27 = arith.addf %18, %26 : vector<16x8xf32>
    %28 = arith.mulf %19, %14 : vector<1x16x16xf32>
    %29 = vector.shape_cast %21 : vector<16x16xf32> to vector<1x16x16xf32>
    %30 = arith.subf %28, %29 : vector<1x16x16xf32>
    "tpu.trace_start"() <{level = 10 : i32, message = "bij,bjf->bif"}> : () -> ()
    %cst_15 = arith.constant dense<0.000000e+00> : vector<1x16x8xf32>
    %31 = tpu.matmul %30, %0, %cst_15 {dimension_numbers = #tpu.dot_dimension_numbers<[2], [1], [1], [2], [0, 0, 0, 1, 1, 2], [0], [0]>} : vector<1x16x16xf32>, vector<1x16x8xf32>, vector<1x16x8xf32> -> vector<1x16x8xf32>
    "tpu.trace_stop"() : () -> ()
    %32 = vector.shape_cast %31 : vector<1x16x8xf32> to vector<16x8xf32>
    %c2 = arith.constant 2 : index
    %c0_16 = arith.constant 0 : index
    %c0_17 = arith.constant 0 : index
    %33 = vector.load %arg3[%c2, %c0_16, %c0_17] : memref<3x8x8xf32, #tpu.memory_space<vmem>>, vector<1x8x8xf32>
    %34 = vector.shape_cast %33 : vector<1x8x8xf32> to vector<8x8xf32>
    %cst_18 = arith.constant dense<0.000000e+00> : vector<16x8xf32>
    %35 = tpu.matmul %32, %34, %cst_18 {dimension_numbers = #tpu.dot_dimension_numbers<[1], [0], [0], [1], [0, 0, 1, 1], [], []>} : vector<16x8xf32>, vector<8x8xf32>, vector<16x8xf32> -> vector<16x8xf32>
    %36 = arith.addf %27, %35 : vector<16x8xf32>
    %cst_19 = arith.constant 0.000000e+00 : f32
    %37 = vector.broadcast %cst_19 : f32 to vector<16x8xf32>
    %38 = arith.maximumf %36, %37 : vector<16x8xf32>
    %39 = vector.shape_cast %38 : vector<16x8xf32> to vector<1x16x8xf32>
    %c0_20 = arith.constant 0 : index
    %c0_21 = arith.constant 0 : index
    %c0_22 = arith.constant 0 : index
    %40 = vector.load %arg4[%c0_20, %c0_21, %c0_22] : memref<1x16x8xf32, #tpu.memory_space<vmem>>, vector<1x16x8xf32>
    tpu.vector_store %arg4[%c0_20, %c0_21, %c0_22], %39 {strides = array<i32>} : memref<1x16x8xf32, #tpu.memory_space<vmem>>, vector<1x16x8xf32>,
    return
  }
  func.func @transform_0(%arg0: i32) -> (i32, i32, i32) {
    %c0_i32 = arith.constant 0 : i32
    %c0_i32_0 = arith.constant 0 : i32
    %c0_i32_1 = arith.constant 0 : i32
    return %arg0, %c0_i32, %c0_i32_0 : i32, i32, i32
  }
  func.func @transform_1(%arg0: i32) -> (i32, i32, i32) {
    %c0_i32 = arith.constant 0 : i32
    %c0_i32_0 = arith.constant 0 : i32
    %c0_i32_1 = arith.constant 0 : i32
    return %arg0, %c0_i32, %c0_i32_0 : i32, i32, i32
  }
  func.func @transform_2(%arg0: i32) -> (i32, i32, i32) {
    %c0_i32 = arith.constant 0 : i32
    %c0_i32_0 = arith.constant 0 : i32
    %c0_i32_1 = arith.constant 0 : i32
    %c0_i32_2 = arith.constant 0 : i32
    return %c0_i32, %c0_i32_0, %c0_i32_1 : i32, i32, i32
  }
  func.func @transform_3(%arg0: i32) -> (i32, i32, i32) {
    %c0_i32 = arith.constant 0 : i32
    %c0_i32_0 = arith.constant 0 : i32
    %c0_i32_1 = arith.constant 0 : i32
    return %arg0, %c0_i32, %c0_i32_0 : i32, i32, i32
  }
}

module attributes {stable_mosaic.version = 11 : i64} {
  func.func @cheb_conv_kernel(%arg0: i32, %arg1: memref<1x16x8xf32, #tpu.memory_space<vmem>>, %arg2: memref<1x16x16xf32, #tpu.memory_space<vmem>>, %arg3: memref<3x8x8xf32, #tpu.memory_space<vmem>>, %arg4: memref<1x16x8xf32, #tpu.memory_space<vmem>>) attributes {dimension_semantics = [#tpu.dimension_semantics<parallel>], iteration_bounds = array<i64: 2>, scalar_prefetch = 0 : i64, scratch_operands = 0 : i64, tpu.core_type = #tpu.core_type<tc>, window_params = [{transform_indices = @transform_0, window_bounds = array<i64: 1, 16, 8>}, {transform_indices = @transform_1, window_bounds = array<i64: 1, 16, 16>}, {pipeline_mode = #tpu.pipeline_mode<synchronous>, transform_indices = @transform_2, window_bounds = array<i64: 3, 8, 8>}, {transform_indices = @transform_3, window_bounds = array<i64: 1, 16, 8>}]} {
    %c0 = arith.constant 0 : index
    %c0_0 = arith.constant 0 : index
    %c0_1 = arith.constant 0 : index
    %0 = vector.load %arg1[%c0, %c0_0, %c0_1] : memref<1x16x8xf32, #tpu.memory_space<vmem>>, vector<1x16x8xf32>
    %c0_2 = arith.constant 0 : index
    %c0_3 = arith.constant 0 : index
    %c0_4 = arith.constant 0 : index
    %1 = vector.load %arg2[%c0_2, %c0_3, %c0_4] : memref<1x16x16xf32, #tpu.memory_space<vmem>>, vector<1x16x16xf32>
    %2 = tpu.iota {dimensions = array<i32: 0>} : vector<16x16xi32>
    %3 = tpu.iota {dimensions = array<i32: 1>} : vector<16x16xi32>
    %4 = arith.cmpi eq, %2, %3 : vector<16x16xi32>
    %cst = arith.constant dense<0.000000e+00> : vector<1x16xf32>
    %5 = vector.multi_reduction <add>, %1, %cst [1] : vector<1x16x16xf32> to vector<1x16xf32>
    %6 = vector.shape_cast %4 : vector<16x16xi1> to vector<1x16x16xi1>
    %7 = vector.shape_cast %5 : vector<1x16xf32> to vector<1x1x16xf32>
    %cst_5 = arith.constant 1.000000e+00 : f32
    %8 = vector.broadcast %cst_5 : f32 to vector<1x1x16xf32>
    %9 = arith.subf %7, %8 : vector<1x1x16xf32>
    %cst_6 = arith.constant 0.000000e+00 : f32
    %10 = vector.shape_cast %9 : vector<1x1x16xf32> to vector<1x1x16xf32>
    %11 = vector.broadcast %10 : vector<1x1x16xf32> to vector<1x16x16xf32>
    %12 = vector.broadcast %cst_6 : f32 to vector<1x16x16xf32>
    %13 = arith.select %6, %11, %12 : vector<1x16x16xi1>, vector<1x16x16xf32>
    %14 = arith.subf %13, %1 : vector<1x16x16xf32>
    %15 = vector.shape_cast %0 : vector<1x16x8xf32> to vector<16x8xf32>
    %c0_7 = arith.constant 0 : index
    %c0_8 = arith.constant 0 : index
    %c0_9 = arith.constant 0 : index
    %16 = vector.load %arg3[%c0_7, %c0_8, %c0_9] : memref<3x8x8xf32, #tpu.memory_space<vmem>>, vector<1x8x8xf32>
    %17 = vector.shape_cast %16 : vector<1x8x8xf32> to vector<8x8xf32>
    %cst_10 = arith.constant dense<0.000000e+00> : vector<16x8xf32>
    %18 = tpu.matmul %15, %17, %cst_10 {dimension_numbers = #tpu.dot_dimension_numbers<[1], [0], [0], [1], [0, 0, 1, 1], [], []>} : vector<16x8xf32>, vector<8x8xf32>, vector<16x8xf32> -> vector<16x8xf32>
    %19 = arith.addf %14, %14 : vector<1x16x16xf32>
    %20 = arith.extui %4 : vector<16x16xi1> to vector<16x16xi32>
    %21 = arith.sitofp %20 : vector<16x16xi32> to vector<16x16xf32>
    "tpu.trace_start"() <{level = 10 : i32, message = "bij,bjf->bif"}> : () -> ()
    %cst_11 = arith.constant dense<0.000000e+00> : vector<1x16x8xf32>
    %22 = tpu.matmul %14, %0, %cst_11 {dimension_numbers = #tpu.dot_dimension_numbers<[2], [1], [1], [2], [0, 0, 0, 1, 1, 2], [0], [0]>} : vector<1x16x16xf32>, vector<1x16x8xf32>, vector<1x16x8xf32> -> vector<1x16x8xf32>
    "tpu.trace_stop"() : () -> ()
    %23 = vector.shape_cast %22 : vector<1x16x8xf32> to vector<16x8xf32>
    %c1 = arith.constant 1 : index
    %c0_12 = arith.constant 0 : index
    %c0_13 = arith.constant 0 : index
    %24 = vector.load %arg3[%c1, %c0_12, %c0_13] : memref<3x8x8xf32, #tpu.memory_space<vmem>>, vector<1x8x8xf32>
    %25 = vector.shape_cast %24 : vector<1x8x8xf32> to vector<8x8xf32>
    %cst_14 = arith.constant dense<0.000000e+00> : vector<16x8xf32>
    %26 = tpu.matmul %23, %25, %cst_14 {dimension_numbers = #tpu.dot_dimension_numbers<[1], [0], [0], [1], [0, 0, 1, 1], [], []>} : vector<16x8xf32>, vector<8x8xf32>, vector<16x8xf32> -> vector<16x8xf32>
    %27 = arith.addf %18, %26 : vector<16x8xf32>
    %28 = arith.mulf %19, %14 : vector<1x16x16xf32>
    %29 = vector.shape_cast %21 : vector<16x16xf32> to vector<1x16x16xf32>
    %30 = arith.subf %28, %29 : vector<1x16x16xf32>
    "tpu.trace_start"() <{level = 10 : i32, message = "bij,bjf->bif"}> : () -> ()
    %cst_15 = arith.constant dense<0.000000e+00> : vector<1x16x8xf32>
    %31 = tpu.matmul %30, %0, %cst_15 {dimension_numbers = #tpu.dot_dimension_numbers<[2], [1], [1], [2], [0, 0, 0, 1, 1, 2], [0], [0]>} : vector<1x16x16xf32>, vector<1x16x8xf32>, vector<1x16x8xf32> -> vector<1x16x8xf32>
    "tpu.trace_stop"() : () -> ()
    %32 = vector.shape_cast %31 : vector<1x16x8xf32> to vector<16x8xf32>
    %c2 = arith.constant 2 : index
    %c0_16 = arith.constant 0 : index
    %c0_17 = arith.constant 0 : index
    %33 = vector.load %arg3[%c2, %c0_16, %c0_17] : memref<3x8x8xf32, #tpu.memory_space<vmem>>, vector<1x8x8xf32>
    %34 = vector.shape_cast %33 : vector<1x8x8xf32> to vector<8x8xf32>
    %cst_18 = arith.constant dense<0.000000e+00> : vector<16x8xf32>
    %35 = tpu.matmul %32, %34, %cst_18 {dimension_numbers = #tpu.dot_dimension_numbers<[1], [0], [0], [1], [0, 0, 1, 1], [], []>} : vector<16x8xf32>, vector<8x8xf32>, vector<16x8xf32> -> vector<16x8xf32>
    %36 = arith.addf %27, %35 : vector<16x8xf32>
    %cst_19 = arith.constant 0.000000e+00 : f32
    %37 = vector.broadcast %cst_19 : f32 to vector<16x8xf32>
    %38 = arith.maximumf %36, %37 : vector<16x8xf32>
    %39 = vector.shape_cast %38 : vector<16x8xf32> to vector<1x16x8xf32>
    %c0_20 = arith.constant 0 : index
    %c0_21 = arith.constant 0 : index
    %c0_22 = arith.constant 0 : index
    %40 = vector.load %arg4[%c0_20, %c0_21, %c0_22] : memref<1x16x8xf32, #tpu.memory_space<vmem>>, vector<1x16x8xf32>
    tpu.vector_store %arg4[%c0_20, %c0_21, %c0_22], %39 {strides = array<i32>} : memref<1x16x8xf32, #tpu.memory_space<vmem>>, vector<1x16x8xf32>,
    return
  }
  func.func @transform_0(%arg0: i32) -> (i32, i32, i32) {
    %c0_i32 = arith.constant 0 : i32
    %c0_i32_0 = arith.constant 0 : i32
    %c0_i32_1 = arith.constant 0 : i32
    return %arg0, %c0_i32, %c0_i32_0 : i32, i32, i32
  }
  func.func @transform_1(%arg0: i32) -> (i32, i32, i32) {
    %c0_i32 = arith.constant 0 : i32
    %c0_i32_0 = arith.constant 0 : i32
    %c0_i32_1 = arith.constant 0 : i32
    return %arg0, %c0_i32, %c0_i32_0 : i32, i32, i32
  }
  func.func @transform_2(%arg0: i32) -> (i32, i32, i32) {
    %c0_i32 = arith.constant 0 : i32
    %c0_i32_0 = arith.constant 0 : i32
    %c0_i32_1 = arith.constant 0 : i32
    %c0_i32_2 = arith.constant 0 : i32
    return %c0_i32, %c0_i32_0, %c0_i32_1 : i32, i32, i32
  }
  func.func @transform_3(%arg0: i32) -> (i32, i32, i32) {
    %c0_i32 = arith.constant 0 : i32
    %c0_i32_0 = arith.constant 0 : i32
    %c0_i32_1 = arith.constant 0 : i32
    return %arg0, %c0_i32, %c0_i32_0 : i32, i32, i32
  }
}

</mosaic_0001>

<llo_original>
// kernel: tpu_custom_call.1
$region0: #{tpu_custom_call.1}
  #allocation0 [shape = 'u32[]', space=smem, size = 0x4, offset = 0x4, fixed_abs, tag = 'smem constant byte address 0x4 - core index']
  #allocation1 [shape = 'u32[144,128]{1,0:T(1,128)}', space=vmem, size = 0x12000, scoped, tag = 'internal scratch']
  %s0 = inlined_call_operand.vmem [shape: f32[2,16,8], index: 0, kind: input, shape index: {}]
  %s1 = inlined_call_operand.vmem [shape: f32[2,16,16], index: 1, kind: input, shape index: {}]
  %s2 = inlined_call_operand.hbm [shape: f32[3,8,8], index: 2, kind: input, shape index: {}]
  %s3 = inlined_call_operand.vmem [shape: f32[2,16,8], index: 3, kind: output, shape index: {}]
  %s4 = sld [smem:[#allocation0]]
  $region49: #{tpu_custom_call.1} parent=0
    _
  %s6 = ssub.s32 1, %s4
  %s7 = scalar_select 0, %s6, %s4
  $region1: #{tpu_custom_call.1} parent=0
    #allocation2 [shape = 'u8[12288]{0}', space=vmem, size = 0x3000, scoped, tag = 'input window, operand 2, single buffered']
    #allocation3 [shape = 's32[2]{0}', space=sflag, size = 0x8, scoped, tag = 'scoped memory for tpu_custom_call.1']
    %8 = vsyncpa [#allocation3], 0
    loop: start=0, step=1, limit=4
    $region2: #{tpu_custom_call.1} parent=1 // loop_pre_header
      _
    $region3: #{tpu_custom_call.1} parent=1 // loop_header
      %s10 = sphi 0, %s14
      %p11 = scmp.ge.s32.totalorder %s10, 4
      %s20 = sphi 0, %s22
      %s23 = sphi 0, %s20
      %s24 = sphi 0, %s23
      %s40 = sphi 0, %s24
      %s46 = sphi 0, %s48
      %s49 = sphi 0, %s46
      %s50 = sphi 0, %s49
      %s66 = sphi 0, %s50
      %s70 = sphi 0, %s70
      %s72 = sphi 0, %s70
      %s73 = sphi 0, %s72
      %s87 = sphi 0, %s73
      %s93 = sphi 0, %s95
      %s96 = sphi 0, %s93
      %s97 = sphi 0, %s96
      %s113 = sphi 0, %s97
    $region4: #{tpu_custom_call.1} parent=1 // loop_header_branch
      %13 = sbr.rel (%p11) target = $region8
    $region5: #{tpu_custom_call.1} parent=1 // loop_body
      %s15 = ssub.s32 %s10, 1
      %s16 = ssub.s32 %s10, 2
      %s17 = sadd.s32 %s10, 1
      %s18 = ssub.s32 %s10, %s17
      %p19 = scmp.eq.s32.totalorder %s18, 0
      %s21 = sadd.s32 %s20, 1
      %s22 = scalar_select %p19, %s20, %s21
      %p25 = pneg %p19
      %p26 = scmp.eq.s32.totalorder %s10, 1
      %p27 = por %p25, %p26
      %p28 = scmp.ne.s32.totalorder %s20, %s23
      %p29 = scmp.eq.s32.totalorder %s10, 0
      %p30 = por %p28, %p29
      %p31 = scmp.ne.s32.totalorder %s20, %s23
      %p32 = scmp.eq.s32.totalorder %s15, 1
      %p33 = por %p31, %p32
      %p34 = scmp.ne.s32.totalorder %s23, %s24
      %p35 = scmp.eq.s32.totalorder %s15, 0
      %p36 = por %p34, %p35
      %p37 = scmp.ne.s32.totalorder %s23, %s24
      %p38 = scmp.eq.s32.totalorder %s16, 1
      %p39 = por %p37, %p38
      %p41 = scmp.ne.s32.totalorder %s24, %s40
      %p42 = scmp.eq.s32.totalorder %s16, 0
      %p43 = por %p41, %p42
      %s44 = ssub.s32 %s10, %s17
      %p45 = scmp.eq.s32.totalorder %s44, 0
      %s47 = sadd.s32 %s46, 1
      %s48 = scalar_select %p45, %s46, %s47
      %p51 = pneg %p45
      %p52 = scmp.eq.s32.totalorder %s10, 1
      %p53 = por %p51, %p52
      %p54 = scmp.ne.s32.totalorder %s46, %s49
      %p55 = scmp.eq.s32.totalorder %s10, 0
      %p56 = por %p54, %p55
      %p57 = scmp.ne.s32.totalorder %s46, %s49
      %p58 = scmp.eq.s32.totalorder %s15, 1
      %p59 = por %p57, %p58
      %p60 = scmp.ne.s32.totalorder %s49, %s50
      %p61 = scmp.eq.s32.totalorder %s15, 0
      %p62 = por %p60, %p61
      %p63 = scmp.ne.s32.totalorder %s49, %s50
      %p64 = scmp.eq.s32.totalorder %s16, 1
      %p65 = por %p63, %p64
      %p67 = scmp.ne.s32.totalorder %s50, %s66
      %p68 = scmp.eq.s32.totalorder %s16, 0
      %p69 = por %p67, %p68
      %s71 = sadd.s32 %s70, 1
      %p74 = scmp.eq.s32.totalorder %s10, 1
      %p75 = scmp.ne.s32.totalorder %s70, %s72
      %p76 = scmp.eq.s32.totalorder %s10, 0
      %p77 = por %p75, %p76
      %p78 = scmp.ne.s32.totalorder %s70, %s72
      %p79 = scmp.eq.s32.totalorder %s15, 1
      %p80 = por %p78, %p79
      %p81 = scmp.ne.s32.totalorder %s72, %s73
      %p82 = scmp.eq.s32.totalorder %s15, 0
      %p83 = por %p81, %p82
      %p84 = scmp.ne.s32.totalorder %s72, %s73
      %p85 = scmp.eq.s32.totalorder %s16, 1
      %p86 = por %p84, %p85
      %p88 = scmp.ne.s32.totalorder %s73, %s87
      %p89 = scmp.eq.s32.totalorder %s16, 0
      %p90 = por %p88, %p89
      %s91 = ssub.s32 %s10, %s17
      %p92 = scmp.eq.s32.totalorder %s91, 0
      %s94 = sadd.s32 %s93, 1
      %s95 = scalar_select %p92, %s93, %s94
      %p98 = pneg %p92
      %p99 = scmp.eq.s32.totalorder %s10, 1
      %p100 = por %p98, %p99
      %p101 = scmp.ne.s32.totalorder %s93, %s96
      %p102 = scmp.eq.s32.totalorder %s10, 0
      %p103 = por %p101, %p102
      %p104 = scmp.ne.s32.totalorder %s93, %s96
      %p105 = scmp.eq.s32.totalorder %s15, 1
      %p106 = por %p104, %p105
      %p107 = scmp.ne.s32.totalorder %s96, %s97
      %p108 = scmp.eq.s32.totalorder %s15, 0
      %p109 = por %p107, %p108
      %p110 = scmp.ne.s32.totalorder %s96, %s97
      %p111 = scmp.eq.s32.totalorder %s16, 1
      %p112 = por %p110, %p111
      %p114 = scmp.ne.s32.totalorder %s97, %s113
      %p115 = scmp.eq.s32.totalorder %s16, 0
      %p116 = por %p114, %p115
      %p117 = scmp.le.s32.totalorder 1, %s10
      %p118 = scmp.lt.s32.totalorder %s10, 3
      %p119 = pnand %p117, %p118
      %p120 = pneg %p119
      // Predicated region
      $region9: #{tpu_custom_call.1} parent=5 // pred_check
        _
      $region10: #{tpu_custom_call.1} parent=5 // pred_check_branch
        %122 = sbr.rel (%p119) target = $region12
      $region11: #{tpu_custom_call.1} parent=5 // pred_region
        %s123 = ssub.s32 %s10, 1
        // Predicated region
        $region13: #{tpu_custom_call.1} parent=11 // pred_check
          %p124 = pneg %p83
        $region14: #{tpu_custom_call.1} parent=11 // pred_check_branch
          %126 = sbr.rel (%p124) target = $region16
        $region15: #{tpu_custom_call.1} parent=11 // pred_region
          %s128 = ssub.s32 384, 384
          %129 = vsyncadd [#allocation3], %s128
          %s130 = sshll.u32 [#allocation2], 4
          %s131 = int_to_ptr.vmem [resolvable:$true] %s130
          %136 = dma.hbm_to_vmem [thread:$0]  %s2, 384, %s131, [#allocation3], 128, 128, 8
        $region16: #{tpu_custom_call.1} parent=11 // pred_fallthru
          _
      $region12: #{tpu_custom_call.1} parent=5 // pred_fallthru
        _
      %p137 = scmp.lt.s32.totalorder %s10, 2
      // Predicated region
      $region17: #{tpu_custom_call.1} parent=5 // pred_check
        %p138 = pneg %p137
      $region18: #{tpu_custom_call.1} parent=5 // pred_check_branch
        %140 = sbr.rel (%p138) target = $region20
      $region19: #{tpu_custom_call.1} parent=5 // pred_region
        // Predicated region
        $region21: #{tpu_custom_call.1} parent=19 // pred_check
          %p141 = pneg %p30
        $region22: #{tpu_custom_call.1} parent=19 // pred_check_branch
          %143 = sbr.rel (%p141) target = $region24
        $region23: #{tpu_custom_call.1} parent=19 // pred_region
          %p144 = scmp.lt.s32.totalorder %s10, 1
          %s145 = scalar_select %p144, %s10, 1
          %s146 = smul.addr %s145, 2
          %s147 = smul.addr %s146, 8
          %s148 = scalar_lea.vmem %s0, %s147
        $region24: #{tpu_custom_call.1} parent=19 // pred_fallthru
          _
        // Predicated region
        $region25: #{tpu_custom_call.1} parent=19 // pred_check
          %p149 = pneg %p56
        $region26: #{tpu_custom_call.1} parent=19 // pred_check_branch
          %151 = sbr.rel (%p149) target = $region28
        $region27: #{tpu_custom_call.1} parent=19 // pred_region
          %p152 = scmp.lt.s32.totalorder %s10, 1
          %s153 = scalar_select %p152, %s10, 1
          %s154 = smul.addr %s153, 2
          %s155 = smul.addr %s154, 8
          %s156 = scalar_lea.vmem %s1, %s155
        $region28: #{tpu_custom_call.1} parent=19 // pred_fallthru
          _
      $region20: #{tpu_custom_call.1} parent=5 // pred_fallthru
        _
      %p157 = scmp.le.s32.totalorder 1, %s10
      %p158 = scmp.lt.s32.totalorder %s10, 3
      %p159 = pnand %p157, %p158
      %p160 = pneg %p159
      // Predicated region
      $region29: #{tpu_custom_call.1} parent=5 // pred_check
        _
      $region30: #{tpu_custom_call.1} parent=5 // pred_check_branch
        %162 = sbr.rel (%p159) target = $region32
      $region31: #{tpu_custom_call.1} parent=5 // pred_region
        %s163 = ssub.s32 %s10, 1
        // Predicated region
        $region33: #{tpu_custom_call.1} parent=31 // pred_check
          %p164 = pneg %p83
        $region34: #{tpu_custom_call.1} parent=31 // pred_check_branch
          %166 = sbr.rel (%p164) target = $region36
        $region35: #{tpu_custom_call.1} parent=31 // pred_region
          %167 = dma.done [#allocation3], 384
        $region36: #{tpu_custom_call.1} parent=31 // pred_fallthru
          _
        %p168 = scmp.lt.s32.totalorder %s15, 1
        %s169 = scalar_select %p168, %s15, 1
        %s170 = smul.addr %s169, 2
        %s171 = smul.addr %s170, 8
        %s172 = scalar_lea.vmem %s0, %s171
        %p173 = pneg %p36
        %p174 = pneg %p33
        %p175 = scmp.lt.s32.totalorder %s15, 1
        %s176 = scalar_select %p175, %s15, 1
        %s177 = smul.addr %s176, 2
        %s178 = smul.addr %s177, 8
        %s179 = scalar_lea.vmem %s1, %s178
        %p180 = pneg %p62
        %p181 = pneg %p59
        %p182 = pneg %p83
        %p183 = pneg %p80
        %p184 = pneg %p109
        %p185 = pneg %p106
        %p186 = scmp.lt.s32.totalorder %s15, 1
        %s187 = scalar_select %p186, %s15, 1
        %s188 = smul.addr %s187, 2
        %s189 = smul.addr %s188, 8
        %s190 = scalar_lea.vmem %s3, %s189
        %p191 = scmp.lt.s32.totalorder %s15, 1
        %s192 = scalar_select %p191, %s15, 1
        %s193 = smul.addr %s192, 2
        %s194 = smul.addr %s193, 8
        %s195 = scalar_lea.vmem %s0, %s194
        %p196 = scmp.lt.s32.totalorder %s15, 1
        %s197 = scalar_select %p196, %s15, 1
        %s198 = smul.addr %s197, 2
        %s199 = smul.addr %s198, 8
        %s200 = scalar_lea.vmem %s1, %s199
        %p201 = scmp.lt.s32.totalorder %s15, 1
        %s202 = scalar_select %p201, %s15, 1
        %s203 = smul.addr %s202, 2
        %s204 = smul.addr %s203, 8
        %s205 = scalar_lea.vmem %s3, %s204
        %v206 = vld [vmem:[%s195] sm:$0xff]
        %v207 = vld [vmem:[%s195 + $0x8] sm:$0xff]
        %v208 = vld [vmem:[%s200] sm:$0xff]
        %v209 = vld [vmem:[%s200 + $0x8] sm:$0xff]
        %v210 = vlaneseq
        %v211 = vshrl.u32 %v210, 7
        %v212 = vadd.s32 %v211, 8
        %v213 = vlaneseq
        %v214 = vand.u32 %v213, 127
        %vm215 = vcmp.eq.s32.totalorder %v211, %v214
        %vm216 = vcmp.eq.s32.totalorder %v212, %v214
        %vm217 = vcmask 130048
        %v218 = vsel %vm217, %v208, 0.0
        %v219 = vsel %vm217, %v209, 0.0
        %v220 = vadd.f32 %v218, %v219
        %v221 = vrot.slane %v220, 4
        %v222 = vadd.f32 %v220, %v221
        %v223 = vrot.slane %v222, 2
        %v224 = vadd.f32 %v222, %v223
        %v225 = vrot.slane %v224, 1
        %v226 = vadd.f32 %v224, %v225
        %v227 = vsub.f32 %v226, 1.0
        %v228 = vsel %vm215, %v227, 0.0
        %v229 = vsel %vm216, %v227, 0.0
        %v230 = vsub.f32 %v228, %v208
        %v231 = vsub.f32 %v229, %v209
        %v232 = vld [vmem:[#allocation2] sm:$0xff]
        %v233 = vadd.f32 %v230, %v230
        %v234 = vadd.f32 %v231, %v231
        %v235 = vsel %vm215, 1, 0
        %v236 = vsel %vm216, 1, 0
        %v237 = vcvt.s32.f32 %v235
        %v238 = vcvt.s32.f32 %v236
        %v240 = vsel %vm217, %v230, 0
        %v243 = vsel %vm217, %v231, 0
        %245 = vmatprep.subr.mxu0 0.0
        %246 = vmatpush1.msra.mxu0 %v206
        %247 = vmatprep.subr.mxu0 0.0
        %248 = vmatpush1.msra.mxu0 %v207
        %249 = vmatprep.subr.mxu0 0.0
        %250 = vmatpush1.msra.mxu0 0.0
        %251 = vmatprep.subr.mxu0 0.0
        %252 = vmatpush1.msra.mxu0 0.0
        %253 = vmatprep.subr.mxu0 0.0
        %254 = vmatpush1.msra.mxu0 0.0
        %255 = vmatprep.subr.mxu0 0.0
        %256 = vmatpush1.msra.mxu0 0.0
        %257 = vmatprep.subr.mxu0 0.0
        %258 = vmatpush1.msra.mxu0 0.0
        %259 = vmatprep.subr.mxu0 0.0
        %260 = vmatpush1.msra.mxu0 0.0
        %261 = vmatprep.subr.mxu0 0.0
        %262 = vmatpush1.msra.mxu0 0.0
        %263 = vmatprep.subr.mxu0 0.0
        %264 = vmatpush1.msra.mxu0 0.0
        %265 = vmatprep.subr.mxu0 0.0
        %266 = vmatpush1.msra.mxu0 0.0
        %267 = vmatprep.subr.mxu0 0.0
        %268 = vmatpush1.msra.mxu0 0.0
        %269 = vmatprep.subr.mxu0 0.0
        %270 = vmatpush1.msra.mxu0 0.0
        %271 = vmatprep.subr.mxu0 0.0
        %272 = vmatpush1.msra.mxu0 0.0
        %273 = vmatprep.subr.mxu0 0.0
        %274 = vmatpush1.msra.mxu0 0.0
        %275 = vmatprep.subr.mxu0 0.0
        %276 = vmatpush1.msra.mxu0 0.0
        %277 = vmatprep.subr.mxu0 0.0
        %278 = vmatpush1.msra.mxu0 0.0
        %279 = vmatprep.subr.mxu0 0.0
        %280 = vmatpush1.msra.mxu0 0.0
        %281 = vmatprep.subr.mxu0 0.0
        %282 = vmatpush1.msra.mxu0 0.0
        %283 = vmatprep.subr.mxu0 0.0
        %284 = vmatpush1.msra.mxu0 0.0
        %285 = vmatprep.subr.mxu0 0.0
        %286 = vmatpush1.msra.mxu0 0.0
        %287 = vmatprep.subr.mxu0 0.0
        %288 = vmatpush1.msra.mxu0 0.0
        %289 = vmatprep.subr.mxu0 0.0
        %290 = vmatpush1.msra.mxu0 0.0
        %291 = vmatprep.subr.mxu0 0.0
        %292 = vmatpush1.msra.mxu0 0.0
        %293 = vmatprep.subr.mxu0 0.0
        %294 = vmatpush1.msra.mxu0 0.0
        %295 = vmatprep.subr.mxu0 0.0
        %296 = vmatpush1.msra.mxu0 0.0
        %297 = vmatprep.subr.mxu0 0.0
        %298 = vmatpush1.msra.mxu0 0.0
        %299 = vmatprep.subr.mxu0 0.0
        %300 = vmatpush1.msra.mxu0 0.0
        %301 = vmatprep.subr.mxu0 0.0
        %302 = vmatpush1.msra.mxu0 0.0
        %303 = vmatprep.subr.mxu0 0.0
        %304 = vmatpush1.msra.mxu0 0.0
        %305 = vmatprep.subr.mxu0 0.0
        %306 = vmatpush1.msra.mxu0 0.0
        %307 = vmatprep.subr.mxu0 0.0
        %308 = vmatpush1.msra.mxu0 0.0
        %309 = vmatprep.mubr.f32.mxu0 0.0
        %310 = vmatmul.mubr.f32.gmra.mrb[0].mxu0 %v240
        %v311 = vpop.f32.mrb[0].mxu0
        %v312 = vadd.f32 0.0, %v311
        %v313 = vpop.f32.mrb[0].mxu0
        %314 = vmatprep.mubr.f32.mxu0 0.0
        %315 = vmatmul.mubr.f32.gmra.mrb[0].mxu0 %v243
        %v316 = vpop.f32.mrb[0].mxu0
        %v317 = vadd.f32 0.0, %v316
        %v318 = vpop.f32.mrb[0].mxu0
        %319 = vdwg.mxu0
        %s320 = scalar_lea.vmem [#allocation2], 8
        %v321 = vld [vmem:[%s320] sm:$0xff]
        %vm322 = vcmask 64512
        %v324 = vsel %vm322, %v312, 0
        %v327 = vsel %vm322, %v317, 0
        %329 = vmatprep.subr.mxu0 0.0
        %330 = vmatpush1.msra.mxu0 %v321
        %331 = vmatprep.subr.mxu0 0.0
        %332 = vmatpush1.msra.mxu0 0.0
        %333 = vmatprep.subr.mxu0 0.0
        %334 = vmatpush1.msra.mxu0 0.0
        %335 = vmatprep.subr.mxu0 0.0
        %336 = vmatpush1.msra.mxu0 0.0
        %337 = vmatprep.subr.mxu0 0.0
        %338 = vmatpush1.msra.mxu0 0.0
        %339 = vmatprep.subr.mxu0 0.0
        %340 = vmatpush1.msra.mxu0 0.0
        %341 = vmatprep.subr.mxu0 0.0
        %342 = vmatpush1.msra.mxu0 0.0
        %343 = vmatprep.subr.mxu0 0.0
        %344 = vmatpush1.msra.mxu0 0.0
        %345 = vmatprep.subr.mxu0 0.0
        %346 = vmatpush1.msra.mxu0 0.0
        %347 = vmatprep.subr.mxu0 0.0
        %348 = vmatpush1.msra.mxu0 0.0
        %349 = vmatprep.subr.mxu0 0.0
        %350 = vmatpush1.msra.mxu0 0.0
        %351 = vmatprep.subr.mxu0 0.0
        %352 = vmatpush1.msra.mxu0 0.0
        %353 = vmatprep.subr.mxu0 0.0
        %354 = vmatpush1.msra.mxu0 0.0
        %355 = vmatprep.subr.mxu0 0.0
        %356 = vmatpush1.msra.mxu0 0.0
        %357 = vmatprep.subr.mxu0 0.0
        %358 = vmatpush1.msra.mxu0 0.0
        %359 = vmatprep.subr.mxu0 0.0
        %360 = vmatpush1.msra.mxu0 0.0
        %361 = vmatprep.subr.mxu0 0.0
        %362 = vmatpush1.msra.mxu0 0.0
        %363 = vmatprep.subr.mxu0 0.0
        %364 = vmatpush1.msra.mxu0 0.0
        %365 = vmatprep.subr.mxu0 0.0
        %366 = vmatpush1.msra.mxu0 0.0
        %367 = vmatprep.subr.mxu0 0.0
        %368 = vmatpush1.msra.mxu0 0.0
        %369 = vmatprep.subr.mxu0 0.0
        %370 = vmatpush1.msra.mxu0 0.0
        %371 = vmatprep.subr.mxu0 0.0
        %372 = vmatpush1.msra.mxu0 0.0
        %373 = vmatprep.subr.mxu0 0.0
        %374 = vmatpush1.msra.mxu0 0.0
        %375 = vmatprep.subr.mxu0 0.0
        %376 = vmatpush1.msra.mxu0 0.0
        %377 = vmatprep.subr.mxu0 0.0
        %378 = vmatpush1.msra.mxu0 0.0
        %379 = vmatprep.subr.mxu0 0.0
        %380 = vmatpush1.msra.mxu0 0.0
        %381 = vmatprep.subr.mxu0 0.0
        %382 = vmatpush1.msra.mxu0 0.0
        %383 = vmatprep.subr.mxu0 0.0
        %384 = vmatpush1.msra.mxu0 0.0
        %385 = vmatprep.subr.mxu0 0.0
        %386 = vmatpush1.msra.mxu0 0.0
        %387 = vmatprep.subr.mxu0 0.0
        %388 = vmatpush1.msra.mxu0 0.0
        %389 = vmatprep.subr.mxu0 0.0
        %390 = vmatpush1.msra.mxu0 0.0
        %391 = vmatprep.subr.mxu0 0.0
        %392 = vmatpush1.msra.mxu0 0.0
        %393 = vmatprep.mubr.f32.mxu0 0.0
        %394 = vmatmul.mubr.f32.gmra.mrb[0].mxu0 %v324
        %v395 = vpop.f32.mrb[0].mxu0
        %v396 = vadd.f32 0.0, %v395
        %v397 = vpop.f32.mrb[0].mxu0
        %398 = vmatprep.mubr.f32.mxu0 0.0
        %399 = vmatmul.mubr.f32.gmra.mrb[0].mxu0 %v327
        %v400 = vpop.f32.mrb[0].mxu0
        %v401 = vadd.f32 0.0, %v400
        %v402 = vpop.f32.mrb[0].mxu0
        %403 = vdwg.mxu0
        %v405 = vsel %vm322, %v206, 0
        %v408 = vsel %vm322, %v207, 0
        %410 = vmatprep.subr.mxu0 0.0
        %411 = vmatpush1.msra.mxu0 %v232
        %412 = vmatprep.subr.mxu0 0.0
        %413 = vmatpush1.msra.mxu0 0.0
        %414 = vmatprep.subr.mxu0 0.0
        %415 = vmatpush1.msra.mxu0 0.0
        %416 = vmatprep.subr.mxu0 0.0
        %417 = vmatpush1.msra.mxu0 0.0
        %418 = vmatprep.subr.mxu0 0.0
        %419 = vmatpush1.msra.mxu0 0.0
        %420 = vmatprep.subr.mxu0 0.0
        %421 = vmatpush1.msra.mxu0 0.0
        %422 = vmatprep.subr.mxu0 0.0
        %423 = vmatpush1.msra.mxu0 0.0
        %424 = vmatprep.subr.mxu0 0.0
        %425 = vmatpush1.msra.mxu0 0.0
        %426 = vmatprep.subr.mxu0 0.0
        %427 = vmatpush1.msra.mxu0 0.0
        %428 = vmatprep.subr.mxu0 0.0
        %429 = vmatpush1.msra.mxu0 0.0
        %430 = vmatprep.subr.mxu0 0.0
        %431 = vmatpush1.msra.mxu0 0.0
        %432 = vmatprep.subr.mxu0 0.0
        %433 = vmatpush1.msra.mxu0 0.0
        %434 = vmatprep.subr.mxu0 0.0
        %435 = vmatpush1.msra.mxu0 0.0
        %436 = vmatprep.subr.mxu0 0.0
        %437 = vmatpush1.msra.mxu0 0.0
        %438 = vmatprep.subr.mxu0 0.0
        %439 = vmatpush1.msra.mxu0 0.0
        %440 = vmatprep.subr.mxu0 0.0
        %441 = vmatpush1.msra.mxu0 0.0
        %442 = vmatprep.subr.mxu0 0.0
        %443 = vmatpush1.msra.mxu0 0.0
        %444 = vmatprep.subr.mxu0 0.0
        %445 = vmatpush1.msra.mxu0 0.0
        %446 = vmatprep.subr.mxu0 0.0
        %447 = vmatpush1.msra.mxu0 0.0
        %448 = vmatprep.subr.mxu0 0.0
        %449 = vmatpush1.msra.mxu0 0.0
        %450 = vmatprep.subr.mxu0 0.0
        %451 = vmatpush1.msra.mxu0 0.0
        %452 = vmatprep.subr.mxu0 0.0
        %453 = vmatpush1.msra.mxu0 0.0
        %454 = vmatprep.subr.mxu0 0.0
        %455 = vmatpush1.msra.mxu0 0.0
        %456 = vmatprep.subr.mxu0 0.0
        %457 = vmatpush1.msra.mxu0 0.0
        %458 = vmatprep.subr.mxu0 0.0
        %459 = vmatpush1.msra.mxu0 0.0
        %460 = vmatprep.subr.mxu0 0.0
        %461 = vmatpush1.msra.mxu0 0.0
        %462 = vmatprep.subr.mxu0 0.0
        %463 = vmatpush1.msra.mxu0 0.0
        %464 = vmatprep.subr.mxu0 0.0
        %465 = vmatpush1.msra.mxu0 0.0
        %466 = vmatprep.subr.mxu0 0.0
        %467 = vmatpush1.msra.mxu0 0.0
        %468 = vmatprep.subr.mxu0 0.0
        %469 = vmatpush1.msra.mxu0 0.0
        %470 = vmatprep.subr.mxu0 0.0
        %471 = vmatpush1.msra.mxu0 0.0
        %472 = vmatprep.subr.mxu0 0.0
        %473 = vmatpush1.msra.mxu0 0.0
        %474 = vmatprep.mubr.f32.mxu0 0.0
        %475 = vmatmul.mubr.f32.gmra.mrb[0].mxu0 %v405
        %v476 = vpop.f32.mrb[0].mxu0
        %v477 = vadd.f32 %v396, %v476
        %v478 = vpop.f32.mrb[0].mxu0
        %479 = vmatprep.mubr.f32.mxu0 0.0
        %480 = vmatmul.mubr.f32.gmra.mrb[0].mxu0 %v408
        %v481 = vpop.f32.mrb[0].mxu0
        %v482 = vadd.f32 %v401, %v481
        %v483 = vpop.f32.mrb[0].mxu0
        %484 = vdwg.mxu0
        %v485 = vmul.f32 %v233, %v230
        %v486 = vmul.f32 %v234, %v231
        %v487 = vsub.f32 %v485, %v237
        %v488 = vsub.f32 %v486, %v238
        %v490 = vsel %vm217, %v487, 0
        %v493 = vsel %vm217, %v488, 0
        %495 = vmatprep.subr.mxu0 0.0
        %496 = vmatpush1.msra.mxu0 %v206
        %497 = vmatprep.subr.mxu0 0.0
        %498 = vmatpush1.msra.mxu0 %v207
        %499 = vmatprep.subr.mxu0 0.0
        %500 = vmatpush1.msra.mxu0 0.0
        %501 = vmatprep.subr.mxu0 0.0
        %502 = vmatpush1.msra.mxu0 0.0
        %503 = vmatprep.subr.mxu0 0.0
        %504 = vmatpush1.msra.mxu0 0.0
        %505 = vmatprep.subr.mxu0 0.0
        %506 = vmatpush1.msra.mxu0 0.0
        %507 = vmatprep.subr.mxu0 0.0
        %508 = vmatpush1.msra.mxu0 0.0
        %509 = vmatprep.subr.mxu0 0.0
        %510 = vmatpush1.msra.mxu0 0.0
        %511 = vmatprep.subr.mxu0 0.0
        %512 = vmatpush1.msra.mxu0 0.0
        %513 = vmatprep.subr.mxu0 0.0
        %514 = vmatpush1.msra.mxu0 0.0
        %515 = vmatprep.subr.mxu0 0.0
        %516 = vmatpush1.msra.mxu0 0.0
        %517 = vmatprep.subr.mxu0 0.0
        %518 = vmatpush1.msra.mxu0 0.0
        %519 = vmatprep.subr.mxu0 0.0
        %520 = vmatpush1.msra.mxu0 0.0
        %521 = vmatprep.subr.mxu0 0.0
        %522 = vmatpush1.msra.mxu0 0.0
        %523 = vmatprep.subr.mxu0 0.0
        %524 = vmatpush1.msra.mxu0 0.0
        %525 = vmatprep.subr.mxu0 0.0
        %526 = vmatpush1.msra.mxu0 0.0
        %527 = vmatprep.subr.mxu0 0.0
        %528 = vmatpush1.msra.mxu0 0.0
        %529 = vmatprep.subr.mxu0 0.0
        %530 = vmatpush1.msra.mxu0 0.0
        %531 = vmatprep.subr.mxu0 0.0
        %532 = vmatpush1.msra.mxu0 0.0
        %533 = vmatprep.subr.mxu0 0.0
        %534 = vmatpush1.msra.mxu0 0.0
        %535 = vmatprep.subr.mxu0 0.0
        %536 = vmatpush1.msra.mxu0 0.0
        %537 = vmatprep.subr.mxu0 0.0
        %538 = vmatpush1.msra.mxu0 0.0
        %539 = vmatprep.subr.mxu0 0.0
        %540 = vmatpush1.msra.mxu0 0.0
        %541 = vmatprep.subr.mxu0 0.0
        %542 = vmatpush1.msra.mxu0 0.0
        %543 = vmatprep.subr.mxu0 0.0
        %544 = vmatpush1.msra.mxu0 0.0
        %545 = vmatprep.subr.mxu0 0.0
        %546 = vmatpush1.msra.mxu0 0.0
        %547 = vmatprep.subr.mxu0 0.0
        %548 = vmatpush1.msra.mxu0 0.0
        %549 = vmatprep.subr.mxu0 0.0
        %550 = vmatpush1.msra.mxu0 0.0
        %551 = vmatprep.subr.mxu0 0.0
        %552 = vmatpush1.msra.mxu0 0.0
        %553 = vmatprep.subr.mxu0 0.0
        %554 = vmatpush1.msra.mxu0 0.0
        %555 = vmatprep.subr.mxu0 0.0
        %556 = vmatpush1.msra.mxu0 0.0
        %557 = vmatprep.subr.mxu0 0.0
        %558 = vmatpush1.msra.mxu0 0.0
        %559 = vmatprep.mubr.f32.mxu0 0.0
        %560 = vmatmul.mubr.f32.gmra.mrb[0].mxu0 %v490
        %v561 = vpop.f32.mrb[0].mxu0
        %v562 = vadd.f32 0.0, %v561
        %v563 = vpop.f32.mrb[0].mxu0
        %564 = vmatprep.mubr.f32.mxu0 0.0
        %565 = vmatmul.mubr.f32.gmra.mrb[0].mxu0 %v493
        %v566 = vpop.f32.mrb[0].mxu0
        %v567 = vadd.f32 0.0, %v566
        %v568 = vpop.f32.mrb[0].mxu0
        %569 = vdwg.mxu0
        %s570 = scalar_lea.vmem [#allocation2], 16
        %v571 = vld [vmem:[%s570] sm:$0xff]
        %v573 = vsel %vm322, %v562, 0
        %v576 = vsel %vm322, %v567, 0
        %578 = vmatprep.subr.mxu0 0.0
        %579 = vmatpush1.msra.mxu0 %v571
        %580 = vmatprep.subr.mxu0 0.0
        %581 = vmatpush1.msra.mxu0 0.0
        %582 = vmatprep.subr.mxu0 0.0
        %583 = vmatpush1.msra.mxu0 0.0
        %584 = vmatprep.subr.mxu0 0.0
        %585 = vmatpush1.msra.mxu0 0.0
        %586 = vmatprep.subr.mxu0 0.0
        %587 = vmatpush1.msra.mxu0 0.0
        %588 = vmatprep.subr.mxu0 0.0
        %589 = vmatpush1.msra.mxu0 0.0
        %590 = vmatprep.subr.mxu0 0.0
        %591 = vmatpush1.msra.mxu0 0.0
        %592 = vmatprep.subr.mxu0 0.0
        %593 = vmatpush1.msra.mxu0 0.0
        %594 = vmatprep.subr.mxu0 0.0
        %595 = vmatpush1.msra.mxu0 0.0
        %596 = vmatprep.subr.mxu0 0.0
        %597 = vmatpush1.msra.mxu0 0.0
        %598 = vmatprep.subr.mxu0 0.0
        %599 = vmatpush1.msra.mxu0 0.0
        %600 = vmatprep.subr.mxu0 0.0
        %601 = vmatpush1.msra.mxu0 0.0
        %602 = vmatprep.subr.mxu0 0.0
        %603 = vmatpush1.msra.mxu0 0.0
        %604 = vmatprep.subr.mxu0 0.0
        %605 = vmatpush1.msra.mxu0 0.0
        %606 = vmatprep.subr.mxu0 0.0
        %607 = vmatpush1.msra.mxu0 0.0
        %608 = vmatprep.subr.mxu0 0.0
        %609 = vmatpush1.msra.mxu0 0.0
        %610 = vmatprep.subr.mxu0 0.0
        %611 = vmatpush1.msra.mxu0 0.0
        %612 = vmatprep.subr.mxu0 0.0
        %613 = vmatpush1.msra.mxu0 0.0
        %614 = vmatprep.subr.mxu0 0.0
        %615 = vmatpush1.msra.mxu0 0.0
        %616 = vmatprep.subr.mxu0 0.0
        %617 = vmatpush1.msra.mxu0 0.0
        %618 = vmatprep.subr.mxu0 0.0
        %619 = vmatpush1.msra.mxu0 0.0
        %620 = vmatprep.subr.mxu0 0.0
        %621 = vmatpush1.msra.mxu0 0.0
        %622 = vmatprep.subr.mxu0 0.0
        %623 = vmatpush1.msra.mxu0 0.0
        %624 = vmatprep.subr.mxu0 0.0
        %625 = vmatpush1.msra.mxu0 0.0
        %626 = vmatprep.subr.mxu0 0.0
        %627 = vmatpush1.msra.mxu0 0.0
        %628 = vmatprep.subr.mxu0 0.0
        %629 = vmatpush1.msra.mxu0 0.0
        %630 = vmatprep.subr.mxu0 0.0
        %631 = vmatpush1.msra.mxu0 0.0
        %632 = vmatprep.subr.mxu0 0.0
        %633 = vmatpush1.msra.mxu0 0.0
        %634 = vmatprep.subr.mxu0 0.0
        %635 = vmatpush1.msra.mxu0 0.0
        %636 = vmatprep.subr.mxu0 0.0
        %637 = vmatpush1.msra.mxu0 0.0
        %638 = vmatprep.subr.mxu0 0.0
        %639 = vmatpush1.msra.mxu0 0.0
        %640 = vmatprep.subr.mxu0 0.0
        %641 = vmatpush1.msra.mxu0 0.0
        %642 = vmatprep.mubr.f32.mxu0 0.0
        %643 = vmatmul.mubr.f32.gmra.mrb[0].mxu0 %v573
        %v644 = vpop.f32.mrb[0].mxu0
        %v645 = vadd.f32 0.0, %v644
        %v646 = vpop.f32.mrb[0].mxu0
        %647 = vmatprep.mubr.f32.mxu0 0.0
        %648 = vmatmul.mubr.f32.gmra.mrb[0].mxu0 %v576
        %v649 = vpop.f32.mrb[0].mxu0
        %v650 = vadd.f32 0.0, %v649
        %v651 = vpop.f32.mrb[0].mxu0
        %652 = vdwg.mxu0
        %v653 = vadd.f32 %v477, %v645
        %v654 = vadd.f32 %v482, %v650
        %v655 = vmax.f32 %v653, 0.0
        %v656 = vmax.f32 %v654, 0.0
        %657 = vst.msk [vmem:[%s205] sm:$0xff] %vm322, %v655
        %658 = vst.msk [vmem:[%s205 + $0x8] sm:$0xff] %vm322, %v656
        %p659 = scmp.lt.s32.totalorder %s15, 1
        %s660 = scalar_select %p659, %s15, 1
        %s661 = smul.addr %s660, 2
        %s662 = smul.addr %s661, 8
        %s663 = scalar_lea.vmem %s3, %s662
        // Predicated region
        $region37: #{tpu_custom_call.1} parent=31 // pred_check
          %p664 = pneg %p106
        $region38: #{tpu_custom_call.1} parent=31 // pred_check_branch
          %666 = sbr.rel (%p664) target = $region40
        $region39: #{tpu_custom_call.1} parent=31 // pred_region
          _
        $region40: #{tpu_custom_call.1} parent=31 // pred_fallthru
          _
      $region32: #{tpu_custom_call.1} parent=5 // pred_fallthru
        _
      %p667 = scmp.le.s32.totalorder 2, %s10
      // Predicated region
      $region41: #{tpu_custom_call.1} parent=5 // pred_check
        %p668 = pneg %p667
      $region42: #{tpu_custom_call.1} parent=5 // pred_check_branch
        %670 = sbr.rel (%p668) target = $region44
      $region43: #{tpu_custom_call.1} parent=5 // pred_region
        %s671 = ssub.s32 %s10, 2
        // Predicated region
        $region45: #{tpu_custom_call.1} parent=43 // pred_check
          %p672 = pneg %p112
        $region46: #{tpu_custom_call.1} parent=43 // pred_check_branch
          %674 = sbr.rel (%p672) target = $region48
        $region47: #{tpu_custom_call.1} parent=43 // pred_region
          %p675 = scmp.lt.s32.totalorder %s16, 1
          %s676 = scalar_select %p675, %s16, 1
          %s677 = smul.addr %s676, 2
          %s678 = smul.addr %s677, 8
          %s679 = scalar_lea.vmem %s3, %s678
        $region48: #{tpu_custom_call.1} parent=43 // pred_fallthru
          _
      $region44: #{tpu_custom_call.1} parent=5 // pred_fallthru
        _
    $region6: #{tpu_custom_call.1} parent=1 // loop_footer
      %s14 = sadd.s32 1, %s10
    $region7: #{tpu_custom_call.1} parent=1 // loop_footer_branch
      %9 = sbr.rel target = $region3
    $region8: #{tpu_custom_call.1} parent=1 // loop_exit
      _
    %680 = vsyncpa [#allocation3], 1
    %s681 = scalar_lea.sflag [#allocation3], 1
    %682 = vsyncpa %s681, 1

// kernel: tpu_custom_call.1
$region0: #{tpu_custom_call.1}
  #allocation0 [shape = 'u32[]', space=smem, size = 0x4, offset = 0x4, fixed_abs, tag = 'smem constant byte address 0x4 - core index']
  #allocation1 [shape = 'u32[144,128]{1,0:T(1,128)}', space=vmem, size = 0x12000, scoped, tag = 'internal scratch']
  %s0 = inlined_call_operand.vmem [shape: f32[2,16,8], index: 0, kind: input, shape index: {}]
  %s1 = inlined_call_operand.vmem [shape: f32[2,16,16], index: 1, kind: input, shape index: {}]
  %s2 = inlined_call_operand.hbm [shape: f32[3,8,8], index: 2, kind: input, shape index: {}]
  %s3 = inlined_call_operand.vmem [shape: f32[2,16,8], index: 3, kind: output, shape index: {}]
  %s4 = sld [smem:[#allocation0]]
  $region49: #{tpu_custom_call.1} parent=0
    _
  %s6 = ssub.s32 1, %s4
  %s7 = scalar_select 0, %s6, %s4
  $region1: #{tpu_custom_call.1} parent=0
    #allocation2 [shape = 'u8[12288]{0}', space=vmem, size = 0x3000, scoped, tag = 'input window, operand 2, single buffered']
    #allocation3 [shape = 's32[2]{0}', space=sflag, size = 0x8, scoped, tag = 'scoped memory for tpu_custom_call.1']
    %8 = vsyncpa [#allocation3], 0
    loop: start=0, step=1, limit=4
    $region2: #{tpu_custom_call.1} parent=1 // loop_pre_header
      _
    $region3: #{tpu_custom_call.1} parent=1 // loop_header
      %s10 = sphi 0, %s14
      %p11 = scmp.ge.s32.totalorder %s10, 4
      %s20 = sphi 0, %s22
      %s23 = sphi 0, %s20
      %s24 = sphi 0, %s23
      %s40 = sphi 0, %s24
      %s46 = sphi 0, %s48
      %s49 = sphi 0, %s46
      %s50 = sphi 0, %s49
      %s66 = sphi 0, %s50
      %s70 = sphi 0, %s70
      %s72 = sphi 0, %s70
      %s73 = sphi 0, %s72
      %s87 = sphi 0, %s73
      %s93 = sphi 0, %s95
      %s96 = sphi 0, %s93
      %s97 = sphi 0, %s96
      %s113 = sphi 0, %s97
    $region4: #{tpu_custom_call.1} parent=1 // loop_header_branch
      %13 = sbr.rel (%p11) target = $region8
    $region5: #{tpu_custom_call.1} parent=1 // loop_body
      %s15 = ssub.s32 %s10, 1
      %s16 = ssub.s32 %s10, 2
      %s17 = sadd.s32 %s10, 1
      %s18 = ssub.s32 %s10, %s17
      %p19 = scmp.eq.s32.totalorder %s18, 0
      %s21 = sadd.s32 %s20, 1
      %s22 = scalar_select %p19, %s20, %s21
      %p25 = pneg %p19
      %p26 = scmp.eq.s32.totalorder %s10, 1
      %p27 = por %p25, %p26
      %p28 = scmp.ne.s32.totalorder %s20, %s23
      %p29 = scmp.eq.s32.totalorder %s10, 0
      %p30 = por %p28, %p29
      %p31 = scmp.ne.s32.totalorder %s20, %s23
      %p32 = scmp.eq.s32.totalorder %s15, 1
      %p33 = por %p31, %p32
      %p34 = scmp.ne.s32.totalorder %s23, %s24
      %p35 = scmp.eq.s32.totalorder %s15, 0
      %p36 = por %p34, %p35
      %p37 = scmp.ne.s32.totalorder %s23, %s24
      %p38 = scmp.eq.s32.totalorder %s16, 1
      %p39 = por %p37, %p38
      %p41 = scmp.ne.s32.totalorder %s24, %s40
      %p42 = scmp.eq.s32.totalorder %s16, 0
      %p43 = por %p41, %p42
      %s44 = ssub.s32 %s10, %s17
      %p45 = scmp.eq.s32.totalorder %s44, 0
      %s47 = sadd.s32 %s46, 1
      %s48 = scalar_select %p45, %s46, %s47
      %p51 = pneg %p45
      %p52 = scmp.eq.s32.totalorder %s10, 1
      %p53 = por %p51, %p52
      %p54 = scmp.ne.s32.totalorder %s46, %s49
      %p55 = scmp.eq.s32.totalorder %s10, 0
      %p56 = por %p54, %p55
      %p57 = scmp.ne.s32.totalorder %s46, %s49
      %p58 = scmp.eq.s32.totalorder %s15, 1
      %p59 = por %p57, %p58
      %p60 = scmp.ne.s32.totalorder %s49, %s50
      %p61 = scmp.eq.s32.totalorder %s15, 0
      %p62 = por %p60, %p61
      %p63 = scmp.ne.s32.totalorder %s49, %s50
      %p64 = scmp.eq.s32.totalorder %s16, 1
      %p65 = por %p63, %p64
      %p67 = scmp.ne.s32.totalorder %s50, %s66
      %p68 = scmp.eq.s32.totalorder %s16, 0
      %p69 = por %p67, %p68
      %s71 = sadd.s32 %s70, 1
      %p74 = scmp.eq.s32.totalorder %s10, 1
      %p75 = scmp.ne.s32.totalorder %s70, %s72
      %p76 = scmp.eq.s32.totalorder %s10, 0
      %p77 = por %p75, %p76
      %p78 = scmp.ne.s32.totalorder %s70, %s72
      %p79 = scmp.eq.s32.totalorder %s15, 1
      %p80 = por %p78, %p79
      %p81 = scmp.ne.s32.totalorder %s72, %s73
      %p82 = scmp.eq.s32.totalorder %s15, 0
      %p83 = por %p81, %p82
      %p84 = scmp.ne.s32.totalorder %s72, %s73
      %p85 = scmp.eq.s32.totalorder %s16, 1
      %p86 = por %p84, %p85
      %p88 = scmp.ne.s32.totalorder %s73, %s87
      %p89 = scmp.eq.s32.totalorder %s16, 0
      %p90 = por %p88, %p89
      %s91 = ssub.s32 %s10, %s17
      %p92 = scmp.eq.s32.totalorder %s91, 0
      %s94 = sadd.s32 %s93, 1
      %s95 = scalar_select %p92, %s93, %s94
      %p98 = pneg %p92
      %p99 = scmp.eq.s32.totalorder %s10, 1
      %p100 = por %p98, %p99
      %p101 = scmp.ne.s32.totalorder %s93, %s96
      %p102 = scmp.eq.s32.totalorder %s10, 0
      %p103 = por %p101, %p102
      %p104 = scmp.ne.s32.totalorder %s93, %s96
      %p105 = scmp.eq.s32.totalorder %s15, 1
      %p106 = por %p104, %p105
      %p107 = scmp.ne.s32.totalorder %s96, %s97
      %p108 = scmp.eq.s32.totalorder %s15, 0
      %p109 = por %p107, %p108
      %p110 = scmp.ne.s32.totalorder %s96, %s97
      %p111 = scmp.eq.s32.totalorder %s16, 1
      %p112 = por %p110, %p111
      %p114 = scmp.ne.s32.totalorder %s97, %s113
      %p115 = scmp.eq.s32.totalorder %s16, 0
      %p116 = por %p114, %p115
      %p117 = scmp.le.s32.totalorder 1, %s10
      %p118 = scmp.lt.s32.totalorder %s10, 3
      %p119 = pnand %p117, %p118
      %p120 = pneg %p119
      // Predicated region
      $region9: #{tpu_custom_call.1} parent=5 // pred_check
        _
      $region10: #{tpu_custom_call.1} parent=5 // pred_check_branch
        %122 = sbr.rel (%p119) target = $region12
      $region11: #{tpu_custom_call.1} parent=5 // pred_region
        %s123 = ssub.s32 %s10, 1
        // Predicated region
        $region13: #{tpu_custom_call.1} parent=11 // pred_check
          %p124 = pneg %p83
        $region14: #{tpu_custom_call.1} parent=11 // pred_check_branch
          %126 = sbr.rel (%p124) target = $region16
        $region15: #{tpu_custom_call.1} parent=11 // pred_region
          %s128 = ssub.s32 384, 384
          %129 = vsyncadd [#allocation3], %s128
          %s130 = sshll.u32 [#allocation2], 4
          %s131 = int_to_ptr.vmem [resolvable:$true] %s130
          %136 = dma.hbm_to_vmem [thread:$0]  %s2, 384, %s131, [#allocation3], 128, 128, 8
        $region16: #{tpu_custom_call.1} parent=11 // pred_fallthru
          _
      $region12: #{tpu_custom_call.1} parent=5 // pred_fallthru
        _
      %p137 = scmp.lt.s32.totalorder %s10, 2
      // Predicated region
      $region17: #{tpu_custom_call.1} parent=5 // pred_check
        %p138 = pneg %p137
      $region18: #{tpu_custom_call.1} parent=5 // pred_check_branch
        %140 = sbr.rel (%p138) target = $region20
      $region19: #{tpu_custom_call.1} parent=5 // pred_region
        // Predicated region
        $region21: #{tpu_custom_call.1} parent=19 // pred_check
          %p141 = pneg %p30
        $region22: #{tpu_custom_call.1} parent=19 // pred_check_branch
          %143 = sbr.rel (%p141) target = $region24
        $region23: #{tpu_custom_call.1} parent=19 // pred_region
          %p144 = scmp.lt.s32.totalorder %s10, 1
          %s145 = scalar_select %p144, %s10, 1
          %s146 = smul.addr %s145, 2
          %s147 = smul.addr %s146, 8
          %s148 = scalar_lea.vmem %s0, %s147
        $region24: #{tpu_custom_call.1} parent=19 // pred_fallthru
          _
        // Predicated region
        $region25: #{tpu_custom_call.1} parent=19 // pred_check
          %p149 = pneg %p56
        $region26: #{tpu_custom_call.1} parent=19 // pred_check_branch
          %151 = sbr.rel (%p149) target = $region28
        $region27: #{tpu_custom_call.1} parent=19 // pred_region
          %p152 = scmp.lt.s32.totalorder %s10, 1
          %s153 = scalar_select %p152, %s10, 1
          %s154 = smul.addr %s153, 2
          %s155 = smul.addr %s154, 8
          %s156 = scalar_lea.vmem %s1, %s155
        $region28: #{tpu_custom_call.1} parent=19 // pred_fallthru
          _
      $region20: #{tpu_custom_call.1} parent=5 // pred_fallthru
        _
      %p157 = scmp.le.s32.totalorder 1, %s10
      %p158 = scmp.lt.s32.totalorder %s10, 3
      %p159 = pnand %p157, %p158
      %p160 = pneg %p159
      // Predicated region
      $region29: #{tpu_custom_call.1} parent=5 // pred_check
        _
      $region30: #{tpu_custom_call.1} parent=5 // pred_check_branch
        %162 = sbr.rel (%p159) target = $region32
      $region31: #{tpu_custom_call.1} parent=5 // pred_region
        %s163 = ssub.s32 %s10, 1
        // Predicated region
        $region33: #{tpu_custom_call.1} parent=31 // pred_check
          %p164 = pneg %p83
        $region34: #{tpu_custom_call.1} parent=31 // pred_check_branch
          %166 = sbr.rel (%p164) target = $region36
        $region35: #{tpu_custom_call.1} parent=31 // pred_region
          %167 = dma.done [#allocation3], 384
        $region36: #{tpu_custom_call.1} parent=31 // pred_fallthru
          _
        %p168 = scmp.lt.s32.totalorder %s15, 1
        %s169 = scalar_select %p168, %s15, 1
        %s170 = smul.addr %s169, 2
        %s171 = smul.addr %s170, 8
        %s172 = scalar_lea.vmem %s0, %s171
        %p173 = pneg %p36
        %p174 = pneg %p33
        %p175 = scmp.lt.s32.totalorder %s15, 1
        %s176 = scalar_select %p175, %s15, 1
        %s177 = smul.addr %s176, 2
        %s178 = smul.addr %s177, 8
        %s179 = scalar_lea.vmem %s1, %s178
        %p180 = pneg %p62
        %p181 = pneg %p59
        %p182 = pneg %p83
        %p183 = pneg %p80
        %p184 = pneg %p109
        %p185 = pneg %p106
        %p186 = scmp.lt.s32.totalorder %s15, 1
        %s187 = scalar_select %p186, %s15, 1
        %s188 = smul.addr %s187, 2
        %s189 = smul.addr %s188, 8
        %s190 = scalar_lea.vmem %s3, %s189
        %p191 = scmp.lt.s32.totalorder %s15, 1
        %s192 = scalar_select %p191, %s15, 1
        %s193 = smul.addr %s192, 2
        %s194 = smul.addr %s193, 8
        %s195 = scalar_lea.vmem %s0, %s194
        %p196 = scmp.lt.s32.totalorder %s15, 1
        %s197 = scalar_select %p196, %s15, 1
        %s198 = smul.addr %s197, 2
        %s199 = smul.addr %s198, 8
        %s200 = scalar_lea.vmem %s1, %s199
        %p201 = scmp.lt.s32.totalorder %s15, 1
        %s202 = scalar_select %p201, %s15, 1
        %s203 = smul.addr %s202, 2
        %s204 = smul.addr %s203, 8
        %s205 = scalar_lea.vmem %s3, %s204
        %v206 = vld [vmem:[%s195] sm:$0xff]
        %v207 = vld [vmem:[%s195 + $0x8] sm:$0xff]
        %v208 = vld [vmem:[%s200] sm:$0xff]
        %v209 = vld [vmem:[%s200 + $0x8] sm:$0xff]
        %v210 = vlaneseq
        %v211 = vshrl.u32 %v210, 7
        %v212 = vadd.s32 %v211, 8
        %v213 = vlaneseq
        %v214 = vand.u32 %v213, 127
        %vm215 = vcmp.eq.s32.totalorder %v211, %v214
        %vm216 = vcmp.eq.s32.totalorder %v212, %v214
        %vm217 = vcmask 130048
        %v218 = vsel %vm217, %v208, 0.0
        %v219 = vsel %vm217, %v209, 0.0
        %v220 = vadd.f32 %v218, %v219
        %v221 = vrot.slane %v220, 4
        %v222 = vadd.f32 %v220, %v221
        %v223 = vrot.slane %v222, 2
        %v224 = vadd.f32 %v222, %v223
        %v225 = vrot.slane %v224, 1
        %v226 = vadd.f32 %v224, %v225
        %v227 = vsub.f32 %v226, 1.0
        %v228 = vsel %vm215, %v227, 0.0
        %v229 = vsel %vm216, %v227, 0.0
        %v230 = vsub.f32 %v228, %v208
        %v231 = vsub.f32 %v229, %v209
        %v232 = vld [vmem:[#allocation2] sm:$0xff]
        %v233 = vadd.f32 %v230, %v230
        %v234 = vadd.f32 %v231, %v231
        %v235 = vsel %vm215, 1, 0
        %v236 = vsel %vm216, 1, 0
        %v237 = vcvt.s32.f32 %v235
        %v238 = vcvt.s32.f32 %v236
        %v240 = vsel %vm217, %v230, 0
        %v243 = vsel %vm217, %v231, 0
        %245 = vmatprep.subr.mxu0 0.0
        %246 = vmatpush1.msra.mxu0 %v206
        %247 = vmatprep.subr.mxu0 0.0
        %248 = vmatpush1.msra.mxu0 %v207
        %249 = vmatprep.subr.mxu0 0.0
        %250 = vmatpush1.msra.mxu0 0.0
        %251 = vmatprep.subr.mxu0 0.0
        %252 = vmatpush1.msra.mxu0 0.0
        %253 = vmatprep.subr.mxu0 0.0
        %254 = vmatpush1.msra.mxu0 0.0
        %255 = vmatprep.subr.mxu0 0.0
        %256 = vmatpush1.msra.mxu0 0.0
        %257 = vmatprep.subr.mxu0 0.0
        %258 = vmatpush1.msra.mxu0 0.0
        %259 = vmatprep.subr.mxu0 0.0
        %260 = vmatpush1.msra.mxu0 0.0
        %261 = vmatprep.subr.mxu0 0.0
        %262 = vmatpush1.msra.mxu0 0.0
        %263 = vmatprep.subr.mxu0 0.0
        %264 = vmatpush1.msra.mxu0 0.0
        %265 = vmatprep.subr.mxu0 0.0
        %266 = vmatpush1.msra.mxu0 0.0
        %267 = vmatprep.subr.mxu0 0.0
        %268 = vmatpush1.msra.mxu0 0.0
        %269 = vmatprep.subr.mxu0 0.0
        %270 = vmatpush1.msra.mxu0 0.0
        %271 = vmatprep.subr.mxu0 0.0
        %272 = vmatpush1.msra.mxu0 0.0
        %273 = vmatprep.subr.mxu0 0.0
        %274 = vmatpush1.msra.mxu0 0.0
        %275 = vmatprep.subr.mxu0 0.0
        %276 = vmatpush1.msra.mxu0 0.0
        %277 = vmatprep.subr.mxu0 0.0
        %278 = vmatpush1.msra.mxu0 0.0
        %279 = vmatprep.subr.mxu0 0.0
        %280 = vmatpush1.msra.mxu0 0.0
        %281 = vmatprep.subr.mxu0 0.0
        %282 = vmatpush1.msra.mxu0 0.0
        %283 = vmatprep.subr.mxu0 0.0
        %284 = vmatpush1.msra.mxu0 0.0
        %285 = vmatprep.subr.mxu0 0.0
        %286 = vmatpush1.msra.mxu0 0.0
        %287 = vmatprep.subr.mxu0 0.0
        %288 = vmatpush1.msra.mxu0 0.0
        %289 = vmatprep.subr.mxu0 0.0
        %290 = vmatpush1.msra.mxu0 0.0
        %291 = vmatprep.subr.mxu0 0.0
        %292 = vmatpush1.msra.mxu0 0.0
        %293 = vmatprep.subr.mxu0 0.0
        %294 = vmatpush1.msra.mxu0 0.0
        %295 = vmatprep.subr.mxu0 0.0
        %296 = vmatpush1.msra.mxu0 0.0
        %297 = vmatprep.subr.mxu0 0.0
        %298 = vmatpush1.msra.mxu0 0.0
        %299 = vmatprep.subr.mxu0 0.0
        %300 = vmatpush1.msra.mxu0 0.0
        %301 = vmatprep.subr.mxu0 0.0
        %302 = vmatpush1.msra.mxu0 0.0
        %303 = vmatprep.subr.mxu0 0.0
        %304 = vmatpush1.msra.mxu0 0.0
        %305 = vmatprep.subr.mxu0 0.0
        %306 = vmatpush1.msra.mxu0 0.0
        %307 = vmatprep.subr.mxu0 0.0
        %308 = vmatpush1.msra.mxu0 0.0
        %309 = vmatprep.mubr.f32.mxu0 0.0
        %310 = vmatmul.mubr.f32.gmra.mrb[0].mxu0 %v240
        %v311 = vpop.f32.mrb[0].mxu0
        %v312 = vadd.f32 0.0, %v311
        %v313 = vpop.f32.mrb[0].mxu0
        %314 = vmatprep.mubr.f32.mxu0 0.0
        %315 = vmatmul.mubr.f32.gmra.mrb[0].mxu0 %v243
        %v316 = vpop.f32.mrb[0].mxu0
        %v317 = vadd.f32 0.0, %v316
        %v318 = vpop.f32.mrb[0].mxu0
        %319 = vdwg.mxu0
        %s320 = scalar_lea.vmem [#allocation2], 8
        %v321 = vld [vmem:[%s320] sm:$0xff]
        %vm322 = vcmask 64512
        %v324 = vsel %vm322, %v312, 0
        %v327 = vsel %vm322, %v317, 0
        %329 = vmatprep.subr.mxu0 0.0
        %330 = vmatpush1.msra.mxu0 %v321
        %331 = vmatprep.subr.mxu0 0.0
        %332 = vmatpush1.msra.mxu0 0.0
        %333 = vmatprep.subr.mxu0 0.0
        %334 = vmatpush1.msra.mxu0 0.0
        %335 = vmatprep.subr.mxu0 0.0
        %336 = vmatpush1.msra.mxu0 0.0
        %337 = vmatprep.subr.mxu0 0.0
        %338 = vmatpush1.msra.mxu0 0.0
        %339 = vmatprep.subr.mxu0 0.0
        %340 = vmatpush1.msra.mxu0 0.0
        %341 = vmatprep.subr.mxu0 0.0
        %342 = vmatpush1.msra.mxu0 0.0
        %343 = vmatprep.subr.mxu0 0.0
        %344 = vmatpush1.msra.mxu0 0.0
        %345 = vmatprep.subr.mxu0 0.0
        %346 = vmatpush1.msra.mxu0 0.0
        %347 = vmatprep.subr.mxu0 0.0
        %348 = vmatpush1.msra.mxu0 0.0
        %349 = vmatprep.subr.mxu0 0.0
        %350 = vmatpush1.msra.mxu0 0.0
        %351 = vmatprep.subr.mxu0 0.0
        %352 = vmatpush1.msra.mxu0 0.0
        %353 = vmatprep.subr.mxu0 0.0
        %354 = vmatpush1.msra.mxu0 0.0
        %355 = vmatprep.subr.mxu0 0.0
        %356 = vmatpush1.msra.mxu0 0.0
        %357 = vmatprep.subr.mxu0 0.0
        %358 = vmatpush1.msra.mxu0 0.0
        %359 = vmatprep.subr.mxu0 0.0
        %360 = vmatpush1.msra.mxu0 0.0
        %361 = vmatprep.subr.mxu0 0.0
        %362 = vmatpush1.msra.mxu0 0.0
        %363 = vmatprep.subr.mxu0 0.0
        %364 = vmatpush1.msra.mxu0 0.0
        %365 = vmatprep.subr.mxu0 0.0
        %366 = vmatpush1.msra.mxu0 0.0
        %367 = vmatprep.subr.mxu0 0.0
        %368 = vmatpush1.msra.mxu0 0.0
        %369 = vmatprep.subr.mxu0 0.0
        %370 = vmatpush1.msra.mxu0 0.0
        %371 = vmatprep.subr.mxu0 0.0
        %372 = vmatpush1.msra.mxu0 0.0
        %373 = vmatprep.subr.mxu0 0.0
        %374 = vmatpush1.msra.mxu0 0.0
        %375 = vmatprep.subr.mxu0 0.0
        %376 = vmatpush1.msra.mxu0 0.0
        %377 = vmatprep.subr.mxu0 0.0
        %378 = vmatpush1.msra.mxu0 0.0
        %379 = vmatprep.subr.mxu0 0.0
        %380 = vmatpush1.msra.mxu0 0.0
        %381 = vmatprep.subr.mxu0 0.0
        %382 = vmatpush1.msra.mxu0 0.0
        %383 = vmatprep.subr.mxu0 0.0
        %384 = vmatpush1.msra.mxu0 0.0
        %385 = vmatprep.subr.mxu0 0.0
        %386 = vmatpush1.msra.mxu0 0.0
        %387 = vmatprep.subr.mxu0 0.0
        %388 = vmatpush1.msra.mxu0 0.0
        %389 = vmatprep.subr.mxu0 0.0
        %390 = vmatpush1.msra.mxu0 0.0
        %391 = vmatprep.subr.mxu0 0.0
        %392 = vmatpush1.msra.mxu0 0.0
        %393 = vmatprep.mubr.f32.mxu0 0.0
        %394 = vmatmul.mubr.f32.gmra.mrb[0].mxu0 %v324
        %v395 = vpop.f32.mrb[0].mxu0
        %v396 = vadd.f32 0.0, %v395
        %v397 = vpop.f32.mrb[0].mxu0
        %398 = vmatprep.mubr.f32.mxu0 0.0
        %399 = vmatmul.mubr.f32.gmra.mrb[0].mxu0 %v327
        %v400 = vpop.f32.mrb[0].mxu0
        %v401 = vadd.f32 0.0, %v400
        %v402 = vpop.f32.mrb[0].mxu0
        %403 = vdwg.mxu0
        %v405 = vsel %vm322, %v206, 0
        %v408 = vsel %vm322, %v207, 0
        %410 = vmatprep.subr.mxu0 0.0
        %411 = vmatpush1.msra.mxu0 %v232
        %412 = vmatprep.subr.mxu0 0.0
        %413 = vmatpush1.msra.mxu0 0.0
        %414 = vmatprep.subr.mxu0 0.0
        %415 = vmatpush1.msra.mxu0 0.0
        %416 = vmatprep.subr.mxu0 0.0
        %417 = vmatpush1.msra.mxu0 0.0
        %418 = vmatprep.subr.mxu0 0.0
        %419 = vmatpush1.msra.mxu0 0.0
        %420 = vmatprep.subr.mxu0 0.0
        %421 = vmatpush1.msra.mxu0 0.0
        %422 = vmatprep.subr.mxu0 0.0
        %423 = vmatpush1.msra.mxu0 0.0
        %424 = vmatprep.subr.mxu0 0.0
        %425 = vmatpush1.msra.mxu0 0.0
        %426 = vmatprep.subr.mxu0 0.0
        %427 = vmatpush1.msra.mxu0 0.0
        %428 = vmatprep.subr.mxu0 0.0
        %429 = vmatpush1.msra.mxu0 0.0
        %430 = vmatprep.subr.mxu0 0.0
        %431 = vmatpush1.msra.mxu0 0.0
        %432 = vmatprep.subr.mxu0 0.0
        %433 = vmatpush1.msra.mxu0 0.0
        %434 = vmatprep.subr.mxu0 0.0
        %435 = vmatpush1.msra.mxu0 0.0
        %436 = vmatprep.subr.mxu0 0.0
        %437 = vmatpush1.msra.mxu0 0.0
        %438 = vmatprep.subr.mxu0 0.0
        %439 = vmatpush1.msra.mxu0 0.0
        %440 = vmatprep.subr.mxu0 0.0
        %441 = vmatpush1.msra.mxu0 0.0
        %442 = vmatprep.subr.mxu0 0.0
        %443 = vmatpush1.msra.mxu0 0.0
        %444 = vmatprep.subr.mxu0 0.0
        %445 = vmatpush1.msra.mxu0 0.0
        %446 = vmatprep.subr.mxu0 0.0
        %447 = vmatpush1.msra.mxu0 0.0
        %448 = vmatprep.subr.mxu0 0.0
        %449 = vmatpush1.msra.mxu0 0.0
        %450 = vmatprep.subr.mxu0 0.0
        %451 = vmatpush1.msra.mxu0 0.0
        %452 = vmatprep.subr.mxu0 0.0
        %453 = vmatpush1.msra.mxu0 0.0
        %454 = vmatprep.subr.mxu0 0.0
        %455 = vmatpush1.msra.mxu0 0.0
        %456 = vmatprep.subr.mxu0 0.0
        %457 = vmatpush1.msra.mxu0 0.0
        %458 = vmatprep.subr.mxu0 0.0
        %459 = vmatpush1.msra.mxu0 0.0
        %460 = vmatprep.subr.mxu0 0.0
        %461 = vmatpush1.msra.mxu0 0.0
        %462 = vmatprep.subr.mxu0 0.0
        %463 = vmatpush1.msra.mxu0 0.0
        %464 = vmatprep.subr.mxu0 0.0
        %465 = vmatpush1.msra.mxu0 0.0
        %466 = vmatprep.subr.mxu0 0.0
        %467 = vmatpush1.msra.mxu0 0.0
        %468 = vmatprep.subr.mxu0 0.0
        %469 = vmatpush1.msra.mxu0 0.0
        %470 = vmatprep.subr.mxu0 0.0
        %471 = vmatpush1.msra.mxu0 0.0
        %472 = vmatprep.subr.mxu0 0.0
        %473 = vmatpush1.msra.mxu0 0.0
        %474 = vmatprep.mubr.f32.mxu0 0.0
        %475 = vmatmul.mubr.f32.gmra.mrb[0].mxu0 %v405
        %v476 = vpop.f32.mrb[0].mxu0
        %v477 = vadd.f32 %v396, %v476
        %v478 = vpop.f32.mrb[0].mxu0
        %479 = vmatprep.mubr.f32.mxu0 0.0
        %480 = vmatmul.mubr.f32.gmra.mrb[0].mxu0 %v408
        %v481 = vpop.f32.mrb[0].mxu0
        %v482 = vadd.f32 %v401, %v481
        %v483 = vpop.f32.mrb[0].mxu0
        %484 = vdwg.mxu0
        %v485 = vmul.f32 %v233, %v230
        %v486 = vmul.f32 %v234, %v231
        %v487 = vsub.f32 %v485, %v237
        %v488 = vsub.f32 %v486, %v238
        %v490 = vsel %vm217, %v487, 0
        %v493 = vsel %vm217, %v488, 0
        %495 = vmatprep.subr.mxu0 0.0
        %496 = vmatpush1.msra.mxu0 %v206
        %497 = vmatprep.subr.mxu0 0.0
        %498 = vmatpush1.msra.mxu0 %v207
        %499 = vmatprep.subr.mxu0 0.0
        %500 = vmatpush1.msra.mxu0 0.0
        %501 = vmatprep.subr.mxu0 0.0
        %502 = vmatpush1.msra.mxu0 0.0
        %503 = vmatprep.subr.mxu0 0.0
        %504 = vmatpush1.msra.mxu0 0.0
        %505 = vmatprep.subr.mxu0 0.0
        %506 = vmatpush1.msra.mxu0 0.0
        %507 = vmatprep.subr.mxu0 0.0
        %508 = vmatpush1.msra.mxu0 0.0
        %509 = vmatprep.subr.mxu0 0.0
        %510 = vmatpush1.msra.mxu0 0.0
        %511 = vmatprep.subr.mxu0 0.0
        %512 = vmatpush1.msra.mxu0 0.0
        %513 = vmatprep.subr.mxu0 0.0
        %514 = vmatpush1.msra.mxu0 0.0
        %515 = vmatprep.subr.mxu0 0.0
        %516 = vmatpush1.msra.mxu0 0.0
        %517 = vmatprep.subr.mxu0 0.0
        %518 = vmatpush1.msra.mxu0 0.0
        %519 = vmatprep.subr.mxu0 0.0
        %520 = vmatpush1.msra.mxu0 0.0
        %521 = vmatprep.subr.mxu0 0.0
        %522 = vmatpush1.msra.mxu0 0.0
        %523 = vmatprep.subr.mxu0 0.0
        %524 = vmatpush1.msra.mxu0 0.0
        %525 = vmatprep.subr.mxu0 0.0
        %526 = vmatpush1.msra.mxu0 0.0
        %527 = vmatprep.subr.mxu0 0.0
        %528 = vmatpush1.msra.mxu0 0.0
        %529 = vmatprep.subr.mxu0 0.0
        %530 = vmatpush1.msra.mxu0 0.0
        %531 = vmatprep.subr.mxu0 0.0
        %532 = vmatpush1.msra.mxu0 0.0
        %533 = vmatprep.subr.mxu0 0.0
        %534 = vmatpush1.msra.mxu0 0.0
        %535 = vmatprep.subr.mxu0 0.0
        %536 = vmatpush1.msra.mxu0 0.0
        %537 = vmatprep.subr.mxu0 0.0
        %538 = vmatpush1.msra.mxu0 0.0
        %539 = vmatprep.subr.mxu0 0.0
        %540 = vmatpush1.msra.mxu0 0.0
        %541 = vmatprep.subr.mxu0 0.0
        %542 = vmatpush1.msra.mxu0 0.0
        %543 = vmatprep.subr.mxu0 0.0
        %544 = vmatpush1.msra.mxu0 0.0
        %545 = vmatprep.subr.mxu0 0.0
        %546 = vmatpush1.msra.mxu0 0.0
        %547 = vmatprep.subr.mxu0 0.0
        %548 = vmatpush1.msra.mxu0 0.0
        %549 = vmatprep.subr.mxu0 0.0
        %550 = vmatpush1.msra.mxu0 0.0
        %551 = vmatprep.subr.mxu0 0.0
        %552 = vmatpush1.msra.mxu0 0.0
        %553 = vmatprep.subr.mxu0 0.0
        %554 = vmatpush1.msra.mxu0 0.0
        %555 = vmatprep.subr.mxu0 0.0
        %556 = vmatpush1.msra.mxu0 0.0
        %557 = vmatprep.subr.mxu0 0.0
        %558 = vmatpush1.msra.mxu0 0.0
        %559 = vmatprep.mubr.f32.mxu0 0.0
        %560 = vmatmul.mubr.f32.gmra.mrb[0].mxu0 %v490
        %v561 = vpop.f32.mrb[0].mxu0
        %v562 = vadd.f32 0.0, %v561
        %v563 = vpop.f32.mrb[0].mxu0
        %564 = vmatprep.mubr.f32.mxu0 0.0
        %565 = vmatmul.mubr.f32.gmra.mrb[0].mxu0 %v493
        %v566 = vpop.f32.mrb[0].mxu0
        %v567 = vadd.f32 0.0, %v566
        %v568 = vpop.f32.mrb[0].mxu0
        %569 = vdwg.mxu0
        %s570 = scalar_lea.vmem [#allocation2], 16
        %v571 = vld [vmem:[%s570] sm:$0xff]
        %v573 = vsel %vm322, %v562, 0
        %v576 = vsel %vm322, %v567, 0
        %578 = vmatprep.subr.mxu0 0.0
        %579 = vmatpush1.msra.mxu0 %v571
        %580 = vmatprep.subr.mxu0 0.0
        %581 = vmatpush1.msra.mxu0 0.0
        %582 = vmatprep.subr.mxu0 0.0
        %583 = vmatpush1.msra.mxu0 0.0
        %584 = vmatprep.subr.mxu0 0.0
        %585 = vmatpush1.msra.mxu0 0.0
        %586 = vmatprep.subr.mxu0 0.0
        %587 = vmatpush1.msra.mxu0 0.0
        %588 = vmatprep.subr.mxu0 0.0
        %589 = vmatpush1.msra.mxu0 0.0
        %590 = vmatprep.subr.mxu0 0.0
        %591 = vmatpush1.msra.mxu0 0.0
        %592 = vmatprep.subr.mxu0 0.0
        %593 = vmatpush1.msra.mxu0 0.0
        %594 = vmatprep.subr.mxu0 0.0
        %595 = vmatpush1.msra.mxu0 0.0
        %596 = vmatprep.subr.mxu0 0.0
        %597 = vmatpush1.msra.mxu0 0.0
        %598 = vmatprep.subr.mxu0 0.0
        %599 = vmatpush1.msra.mxu0 0.0
        %600 = vmatprep.subr.mxu0 0.0
        %601 = vmatpush1.msra.mxu0 0.0
        %602 = vmatprep.subr.mxu0 0.0
        %603 = vmatpush1.msra.mxu0 0.0
        %604 = vmatprep.subr.mxu0 0.0
        %605 = vmatpush1.msra.mxu0 0.0
        %606 = vmatprep.subr.mxu0 0.0
        %607 = vmatpush1.msra.mxu0 0.0
        %608 = vmatprep.subr.mxu0 0.0
        %609 = vmatpush1.msra.mxu0 0.0
        %610 = vmatprep.subr.mxu0 0.0
        %611 = vmatpush1.msra.mxu0 0.0
        %612 = vmatprep.subr.mxu0 0.0
        %613 = vmatpush1.msra.mxu0 0.0
        %614 = vmatprep.subr.mxu0 0.0
        %615 = vmatpush1.msra.mxu0 0.0
        %616 = vmatprep.subr.mxu0 0.0
        %617 = vmatpush1.msra.mxu0 0.0
        %618 = vmatprep.subr.mxu0 0.0
        %619 = vmatpush1.msra.mxu0 0.0
        %620 = vmatprep.subr.mxu0 0.0
        %621 = vmatpush1.msra.mxu0 0.0
        %622 = vmatprep.subr.mxu0 0.0
        %623 = vmatpush1.msra.mxu0 0.0
        %624 = vmatprep.subr.mxu0 0.0
        %625 = vmatpush1.msra.mxu0 0.0
        %626 = vmatprep.subr.mxu0 0.0
        %627 = vmatpush1.msra.mxu0 0.0
        %628 = vmatprep.subr.mxu0 0.0
        %629 = vmatpush1.msra.mxu0 0.0
        %630 = vmatprep.subr.mxu0 0.0
        %631 = vmatpush1.msra.mxu0 0.0
        %632 = vmatprep.subr.mxu0 0.0
        %633 = vmatpush1.msra.mxu0 0.0
        %634 = vmatprep.subr.mxu0 0.0
        %635 = vmatpush1.msra.mxu0 0.0
        %636 = vmatprep.subr.mxu0 0.0
        %637 = vmatpush1.msra.mxu0 0.0
        %638 = vmatprep.subr.mxu0 0.0
        %639 = vmatpush1.msra.mxu0 0.0
        %640 = vmatprep.subr.mxu0 0.0
        %641 = vmatpush1.msra.mxu0 0.0
        %642 = vmatprep.mubr.f32.mxu0 0.0
        %643 = vmatmul.mubr.f32.gmra.mrb[0].mxu0 %v573
        %v644 = vpop.f32.mrb[0].mxu0
        %v645 = vadd.f32 0.0, %v644
        %v646 = vpop.f32.mrb[0].mxu0
        %647 = vmatprep.mubr.f32.mxu0 0.0
        %648 = vmatmul.mubr.f32.gmra.mrb[0].mxu0 %v576
        %v649 = vpop.f32.mrb[0].mxu0
        %v650 = vadd.f32 0.0, %v649
        %v651 = vpop.f32.mrb[0].mxu0
        %652 = vdwg.mxu0
        %v653 = vadd.f32 %v477, %v645
        %v654 = vadd.f32 %v482, %v650
        %v655 = vmax.f32 %v653, 0.0
        %v656 = vmax.f32 %v654, 0.0
        %657 = vst.msk [vmem:[%s205] sm:$0xff] %vm322, %v655
        %658 = vst.msk [vmem:[%s205 + $0x8] sm:$0xff] %vm322, %v656
        %p659 = scmp.lt.s32.totalorder %s15, 1
        %s660 = scalar_select %p659, %s15, 1
        %s661 = smul.addr %s660, 2
        %s662 = smul.addr %s661, 8
        %s663 = scalar_lea.vmem %s3, %s662
        // Predicated region
        $region37: #{tpu_custom_call.1} parent=31 // pred_check
          %p664 = pneg %p106
        $region38: #{tpu_custom_call.1} parent=31 // pred_check_branch
          %666 = sbr.rel (%p664) target = $region40
        $region39: #{tpu_custom_call.1} parent=31 // pred_region
          _
        $region40: #{tpu_custom_call.1} parent=31 // pred_fallthru
          _
      $region32: #{tpu_custom_call.1} parent=5 // pred_fallthru
        _
      %p667 = scmp.le.s32.totalorder 2, %s10
      // Predicated region
      $region41: #{tpu_custom_call.1} parent=5 // pred_check
        %p668 = pneg %p667
      $region42: #{tpu_custom_call.1} parent=5 // pred_check_branch
        %670 = sbr.rel (%p668) target = $region44
      $region43: #{tpu_custom_call.1} parent=5 // pred_region
        %s671 = ssub.s32 %s10, 2
        // Predicated region
        $region45: #{tpu_custom_call.1} parent=43 // pred_check
          %p672 = pneg %p112
        $region46: #{tpu_custom_call.1} parent=43 // pred_check_branch
          %674 = sbr.rel (%p672) target = $region48
        $region47: #{tpu_custom_call.1} parent=43 // pred_region
          %p675 = scmp.lt.s32.totalorder %s16, 1
          %s676 = scalar_select %p675, %s16, 1
          %s677 = smul.addr %s676, 2
          %s678 = smul.addr %s677, 8
          %s679 = scalar_lea.vmem %s3, %s678
        $region48: #{tpu_custom_call.1} parent=43 // pred_fallthru
          _
      $region44: #{tpu_custom_call.1} parent=5 // pred_fallthru
        _
    $region6: #{tpu_custom_call.1} parent=1 // loop_footer
      %s14 = sadd.s32 1, %s10
    $region7: #{tpu_custom_call.1} parent=1 // loop_footer_branch
      %9 = sbr.rel target = $region3
    $region8: #{tpu_custom_call.1} parent=1 // loop_exit
      _
    %680 = vsyncpa [#allocation3], 1
    %s681 = scalar_lea.sflag [#allocation3], 1
    %682 = vsyncpa %s681, 1

</llo_original>
